<compile_context>
chip_gen: v7x
topology: tpu7x:2x2x1
jax: 0.10.0
libtpu: 0.0.40
codegen_flags: <defaults>
</compile_context>

<pallas_src>
import functools

import numpy as np
import jax
import jax.numpy as jnp
from jax.experimental import pallas as pl
from jax.experimental.pallas import tpu as pltpu

OUT_H, OUT_W = 256, 256
_MIB = 1024 * 1024


# ----------------------------------------------------------------------------
# Interpolation matrices (host-built, cached on device).
# ----------------------------------------------------------------------------
def _bilinear_matrix(in_size: int, out_size: int) -> np.ndarray:
    """Row-interpolation matrix M (out_size, in_size): out = M @ in.
    align_corners=False / half-pixel-center convention (PyTorch default)."""
    i = np.arange(out_size, dtype=np.float64)
    src = (i + 0.5) * (in_size / out_size) - 0.5
    i0 = np.floor(src)
    frac = src - i0
    i0 = i0.astype(np.int64)
    i1 = i0 + 1
    w0 = 1.0 - frac
    w1 = frac
    i0c = np.clip(i0, 0, in_size - 1)
    i1c = np.clip(i1, 0, in_size - 1)
    M = np.zeros((out_size, in_size), dtype=np.float64)
    M[np.arange(out_size), i0c] += w0
    M[np.arange(out_size), i1c] += w1
    return M.astype(np.float32)


@functools.lru_cache(maxsize=None)
def _interp_matrix(in_size: int, out_size: int) -> jax.Array:
    """Cached (out_size, in_size) interpolation matrix on device."""
    return jnp.asarray(_bilinear_matrix(in_size, out_size))


@functools.lru_cache(maxsize=None)
def _interp_matrix_T(in_size: int, out_size: int) -> jax.Array:
    """Cached transposed (in_size, out_size) interpolation matrix on device."""
    return jnp.asarray(_bilinear_matrix(in_size, out_size).T)


# ----------------------------------------------------------------------------
# VMEM accounting with (8, 128) sublane/lane padding.
# ----------------------------------------------------------------------------
def _round_up(v: int, m: int) -> int:
    return ((v + m - 1) // m) * m


def _pad2(rows: int, cols: int, itemsize: int) -> int:
    """Bytes of a 2-D (rows, cols) VMEM tile including (8, 128) padding."""
    return _round_up(rows, 8) * _round_up(cols, 128) * itemsize


def _vmem_terms(H: int, W: int, itemsize: int):
    """(resident weight bytes, per-plane bytes) — both double-buffer-aware."""
    weights = 2 * (_pad2(OUT_H, H, 4) + _pad2(W, OUT_W, 4))
    per_plane = (
        2 * _pad2(H, W, itemsize)            # double-buffered input block
        + 2 * _pad2(OUT_H, OUT_W, itemsize)  # double-buffered output block
        + _pad2(OUT_H, W, 4)                 # stage-1 (row-interp) intermediate
        + _pad2(OUT_H, OUT_W, 4)             # stage-2 (col-interp) f32 result
    )
    if itemsize != 4:
        per_plane += _pad2(H, W, 4)          # f32 cast of the current plane
    return weights, per_plane


def _vmem_footprint(tile: int, H: int, W: int, itemsize: int) -> int:
    weights, per_plane = _vmem_terms(H, W, itemsize)
    return weights + tile * per_plane


def _vmem_caps():
    """(tile-selection budget, vmem_limit ceiling) in bytes, per chip gen."""
    try:
        phys = int(pltpu.get_tpu_info().vmem_capacity_bytes)
    except Exception:
        phys = 64 * _MIB  # conservative: v7x has the smallest VMEM per core
    budget = min(max(phys // 3, 8 * _MIB), 48 * _MIB)
    ceiling = max(phys - 8 * _MIB, 16 * _MIB)
    return budget, ceiling


def _choose_tile_bc(n_planes: int, H: int, W: int, itemsize: int,
                    budget: int) -> int:
    """How many (H, W) planes to process per grid step (a divisor of n)."""
    weights, per_plane = _vmem_terms(H, W, itemsize)
    cap = max(1, (budget - weights) // per_plane)
    cap = min(cap, 16, n_planes)
    # Guarantee >= min(n, 4) grid steps so the parallel axis gives each
    # TensorCore (v7x has 2) multiple steps to pipeline DMA against compute.
    min_steps = min(n_planes, 4)
    cap = min(cap, max(1, n_planes // min_steps))
    # Largest divisor of n_planes that fits the cap -> no wrapper-side padding.
    tile = 1
    for d in range(1, cap + 1):
        if n_planes % d == 0:
            tile = d
    return int(tile)


# ----------------------------------------------------------------------------
# Kernel.
# ----------------------------------------------------------------------------
def _resize_kernel(a_ref, b_ref, x_ref, o_ref):
    # a_ref: (OUT_H, H)           row-interp weights (resident)
    # b_ref: (W, OUT_W)           col-interp weights, pre-transposed (resident)
    # x_ref: (T, H, W)            T image planes for this grid step
    # o_ref: (T, OUT_H, OUT_W)
    T, H, W = x_ref.shape
    a = a_ref[...]  # (OUT_H, H) f32

    # Stage 1: per-plane row interpolation -> small (OUT_H, W) results.
    # OUT_H = 256 is 8-aligned, so stacking along the sublane axis is free.
    if T == 1:
        s = jnp.dot(a, x_ref[0].astype(jnp.float32),
                    preferred_element_type=jnp.float32)          # (OUT_H, W)
    else:
        s = jnp.concatenate(
            [jnp.dot(a, x_ref[t].astype(jnp.float32),
                     preferred_element_type=jnp.float32) for t in range(T)],
            axis=0)                                              # (T*OUT_H, W)

    # Stage 2: one fused big-M column-interp matmul; the (T*OUT_H, OUT_W)
    # result maps 1:1 onto o_ref as a single contiguous lane-dense store.
    out = jnp.dot(s, b_ref[...], preferred_element_type=jnp.float32)

    if jnp.issubdtype(o_ref.dtype, jnp.integer):
        info = jnp.iinfo(o_ref.dtype)
        out = jnp.clip(jnp.round(out), float(info.min), float(info.max))

    o_ref[...] = out.reshape(T, OUT_H, OUT_W).astype(o_ref.dtype)


# ----------------------------------------------------------------------------
# Wrapper.
# ----------------------------------------------------------------------------
def resize_bilinear_256(x: jax.Array) -> jax.Array:
    """Equivalent of Resizer.forward: NCHW -> NCHW resized to (256, 256)."""
    B, C, H, W = x.shape
    A = _interp_matrix(H, OUT_H)       # (256, H)
    Bm = _interp_matrix_T(W, OUT_W)    # (W, 256)

    n = B * C
    itemsize = jnp.dtype(x.dtype).itemsize
    budget, ceiling = _vmem_caps()
    tile_bc = _choose_tile_bc(n, H, W, itemsize, budget)

    xf = x.reshape(n, H, W)            # tile_bc divides n -> no padding copy
    grid = (n // tile_bc,)

    footprint = _vmem_footprint(tile_bc, H, W, itemsize)
    vmem_limit = int(min(max(footprint + 4 * _MIB, 16 * _MIB), ceiling))

    cost = pl.CostEstimate(
        flops=int(2 * n * OUT_H * W * (H + OUT_W)),
        transcendentals=0,
        bytes_accessed=int(n * (H * W + OUT_H * OUT_W) * itemsize
                           + (OUT_H * H + W * OUT_W) * 4),
    )

    out = pl.pallas_call(
        _resize_kernel,
        out_shape=jax.ShapeDtypeStruct((n, OUT_H, OUT_W), x.dtype),
        grid_spec=pltpu.PrefetchScalarGridSpec(
            num_scalar_prefetch=0,
            grid=grid,
            in_specs=[
                pl.BlockSpec((OUT_H, H), lambda i: (0, 0)),           # A, resident
                pl.BlockSpec((W, OUT_W), lambda i: (0, 0)),           # B, resident
                pl.BlockSpec((tile_bc, H, W), lambda i: (i, 0, 0)),   # planes
            ],
            out_specs=pl.BlockSpec((tile_bc, OUT_H, OUT_W), lambda i: (i, 0, 0)),
        ),
        compiler_params=pltpu.CompilerParams(
            dimension_semantics=("parallel",),
            vmem_limit_bytes=vmem_limit,
        ),
        cost_estimate=cost,
    )(A, Bm, xf)

    return out.reshape(B, C, OUT_H, OUT_W)


if __name__ == "__main__":
    key = jax.random.PRNGKey(0)
    # Small input consistent with an image batch: B=2, C=4 (e.g. RGBA), 16x16 spatial.
    x = jax.random.uniform(key, (2, 4, 16, 16), dtype=jnp.float32)

    y = resize_bilinear_256(x)
    y = jax.block_until_ready(y)

    assert y.shape == (2, 4, OUT_H, OUT_W), y.shape
    assert y.dtype == x.dtype

    # Pure-JAX reference with the same interpolation matrices (checks the kernel's matmul path).
    A = _interp_matrix(16, OUT_H)
    Bm = _interp_matrix_T(16, OUT_W)
    y_ref = jnp.einsum("oh,bchw,wk->bcok", A, x.astype(jnp.float32), Bm)
    np.testing.assert_allclose(np.asarray(y), np.asarray(y_ref), rtol=1e-4, atol=1e-4)

    print("KERNEL_OK")
</pallas_src>

<mosaic_0001>
module attributes {stable_mosaic.version = 11 : i64} {
  func.func @_resize_kernel(%arg0: i32, %arg1: memref<256x16xf32, #tpu.memory_space<vmem>>, %arg2: memref<16x256xf32, #tpu.memory_space<vmem>>, %arg3: memref<2x16x16xf32, #tpu.memory_space<vmem>>, %arg4: memref<2x256x256xf32, #tpu.memory_space<vmem>>) attributes {dimension_semantics = [#tpu.dimension_semantics<parallel>], iteration_bounds = array<i64: 4>, scalar_prefetch = 0 : i64, scratch_operands = 0 : i64, tpu.core_type = #tpu.core_type<tc>, window_params = [{pipeline_mode = #tpu.pipeline_mode<synchronous>, transform_indices = @transform_0, window_bounds = array<i64: 256, 16>}, {pipeline_mode = #tpu.pipeline_mode<synchronous>, transform_indices = @transform_1, window_bounds = array<i64: 16, 256>}, {transform_indices = @transform_2, window_bounds = array<i64: 2, 16, 16>}, {transform_indices = @transform_3, window_bounds = array<i64: 2, 256, 256>}]} {
    %c0 = arith.constant 0 : index
    %c0_0 = arith.constant 0 : index
    %0 = vector.load %arg1[%c0, %c0_0] : memref<256x16xf32, #tpu.memory_space<vmem>>, vector<256x16xf32>
    %c0_1 = arith.constant 0 : index
    %c0_2 = arith.constant 0 : index
    %c0_3 = arith.constant 0 : index
    %1 = vector.load %arg3[%c0_1, %c0_2, %c0_3] : memref<2x16x16xf32, #tpu.memory_space<vmem>>, vector<1x16x16xf32>
    %2 = vector.shape_cast %1 : vector<1x16x16xf32> to vector<16x16xf32>
    %cst = arith.constant dense<0.000000e+00> : vector<256x16xf32>
    %3 = tpu.matmul %0, %2, %cst {dimension_numbers = #tpu.dot_dimension_numbers<[1], [0], [0], [1], [0, 0, 1, 1], [], []>} : vector<256x16xf32>, vector<16x16xf32>, vector<256x16xf32> -> vector<256x16xf32>
    %c1 = arith.constant 1 : index
    %c0_4 = arith.constant 0 : index
    %c0_5 = arith.constant 0 : index
    %4 = vector.load %arg3[%c1, %c0_4, %c0_5] : memref<2x16x16xf32, #tpu.memory_space<vmem>>, vector<1x16x16xf32>
    %5 = vector.shape_cast %4 : vector<1x16x16xf32> to vector<16x16xf32>
    %cst_6 = arith.constant dense<0.000000e+00> : vector<256x16xf32>
    %6 = tpu.matmul %0, %5, %cst_6 {dimension_numbers = #tpu.dot_dimension_numbers<[1], [0], [0], [1], [0, 0, 1, 1], [], []>} : vector<256x16xf32>, vector<16x16xf32>, vector<256x16xf32> -> vector<256x16xf32>
    %7 = tpu.concatenate %3, %6 in 0 : vector<256x16xf32>, vector<256x16xf32> -> vector<512x16xf32>
    %c0_7 = arith.constant 0 : index
    %c0_8 = arith.constant 0 : index
    %8 = vector.load %arg2[%c0_7, %c0_8] : memref<16x256xf32, #tpu.memory_space<vmem>>, vector<16x256xf32>
    %cst_9 = arith.constant dense<0.000000e+00> : vector<512x256xf32>
    %9 = tpu.matmul %7, %8, %cst_9 {dimension_numbers = #tpu.dot_dimension_numbers<[1], [0], [0], [1], [0, 0, 1, 1], [], []>} : vector<512x16xf32>, vector<16x256xf32>, vector<512x256xf32> -> vector<512x256xf32>
    %10 = vector.shape_cast %9 : vector<512x256xf32> to vector<2x256x256xf32>
    %c0_10 = arith.constant 0 : index
    %c0_11 = arith.constant 0 : index
    %c0_12 = arith.constant 0 : index
    %11 = vector.load %arg4[%c0_10, %c0_11, %c0_12] : memref<2x256x256xf32, #tpu.memory_space<vmem>>, vector<2x256x256xf32>
    tpu.vector_store %arg4[%c0_10, %c0_11, %c0_12], %10 {strides = array<i32>} : memref<2x256x256xf32, #tpu.memory_space<vmem>>, vector<2x256x256xf32>,
    return
  }
  func.func @transform_0(%arg0: i32) -> (i32, i32) {
    %c0_i32 = arith.constant 0 : i32
    %c0_i32_0 = arith.constant 0 : i32
    %c0_i32_1 = arith.constant 0 : i32
    return %c0_i32, %c0_i32_0 : i32, i32
  }
  func.func @transform_1(%arg0: i32) -> (i32, i32) {
    %c0_i32 = arith.constant 0 : i32
    %c0_i32_0 = arith.constant 0 : i32
    %c0_i32_1 = arith.constant 0 : i32
    return %c0_i32, %c0_i32_0 : i32, i32
  }
  func.func @transform_2(%arg0: i32) -> (i32, i32, i32) {
    %c0_i32 = arith.constant 0 : i32
    %c0_i32_0 = arith.constant 0 : i32
    %c0_i32_1 = arith.constant 0 : i32
    return %arg0, %c0_i32, %c0_i32_0 : i32, i32, i32
  }
  func.func @transform_3(%arg0: i32) -> (i32, i32, i32) {
    %c0_i32 = arith.constant 0 : i32
    %c0_i32_0 = arith.constant 0 : i32
    %c0_i32_1 = arith.constant 0 : i32
    return %arg0, %c0_i32, %c0_i32_0 : i32, i32, i32
  }
}

</mosaic_0001>

<llo_original>
// kernel: tpu_custom_call.1
$region0: #{tpu_custom_call.1}
  #allocation0 [shape = 'u32[]', space=smem, size = 0x4, offset = 0x4, fixed_abs, tag = 'smem constant byte address 0x4 - core index']
  #allocation1 [shape = 'u32[144,128]{1,0:T(1,128)}', space=vmem, size = 0x12000, scoped, tag = 'internal scratch']
  %s0 = inlined_call_operand.vmem [shape: f32[256,16], index: 0, kind: input, shape index: {}]
  %s1 = inlined_call_operand.hbm [shape: f32[16,256], index: 1, kind: input, shape index: {}]
  %s2 = inlined_call_operand.hbm [shape: f32[8,16,16], index: 2, kind: input, shape index: {}]
  %s3 = inlined_call_operand.hbm [shape: f32[8,256,256], index: 3, kind: output, shape index: {}]
  %s4 = sld [smem:[#allocation0]]
  $region53: #{tpu_custom_call.1} parent=0
    _
  %s6 = ssub.s32 1, %s4
  %s7 = scalar_select 0, %s6, %s4
  $region1: #{tpu_custom_call.1} parent=0
    #allocation2 [shape = 'u8[16384]{0}', space=vmem, size = 0x4000, scoped, tag = 'input window, operand 1, single buffered']
    #allocation3 [shape = 's32[2]{0}', space=sflag, size = 0x8, scoped, tag = 'scoped memory for tpu_custom_call.1']
    #allocation4 [shape = 's32[2]{0}', space=sflag, size = 0x8, scoped, tag = 'scoped memory for tpu_custom_call.1']
    #allocation5 [shape = 'u8[32768]{0}', space=vmem, size = 0x8000, scoped, tag = 'input window, operand 2']
    #allocation6 [shape = 's32[2]{0}', space=sflag, size = 0x8, scoped, tag = 'scoped memory for tpu_custom_call.1']
    #allocation7 [shape = 'u8[1048576]{0}', space=vmem, size = 0x100000, scoped, tag = 'output window, operand 0']
    %8 = vsyncpa [#allocation3], 0
    %9 = vsyncpa [#allocation6], 0
    %s10 = scalar_lea.sflag [#allocation6], 1
    %11 = vsyncpa %s10, 0
    %12 = vsyncpa [#allocation4], 0
    %s13 = scalar_lea.sflag [#allocation4], 1
    %14 = vsyncpa %s13, 0
    loop: start=0, step=1, limit=6
    $region2: #{tpu_custom_call.1} parent=1 // loop_pre_header
      _
    $region3: #{tpu_custom_call.1} parent=1 // loop_header
      %s16 = sphi 0, %s20
      %p17 = scmp.ge.s32.totalorder %s16, 6
      %s24 = sphi 0, %s24
      %s26 = sphi 0, %s24
      %s27 = sphi 0, %s26
      %s41 = sphi 0, %s27
      %s45 = sphi 0, %s45
      %s47 = sphi 0, %s45
      %s48 = sphi 0, %s47
      %s62 = sphi 0, %s48
      %s68 = sphi 0, %s70
      %s71 = sphi 0, %s68
      %s72 = sphi 0, %s71
      %s88 = sphi 0, %s72
      %s94 = sphi 0, %s96
      %s97 = sphi 0, %s94
      %s98 = sphi 0, %s97
      %s114 = sphi 0, %s98
    $region4: #{tpu_custom_call.1} parent=1 // loop_header_branch
      %19 = sbr.rel (%p17) target = $region8
    $region5: #{tpu_custom_call.1} parent=1 // loop_body
      %s21 = ssub.s32 %s16, 1
      %s22 = ssub.s32 %s16, 2
      %s23 = sadd.s32 %s16, 1
      %s25 = sadd.s32 %s24, 1
      %p28 = scmp.eq.s32.totalorder %s16, 3
      %p29 = scmp.ne.s32.totalorder %s24, %s26
      %p30 = scmp.eq.s32.totalorder %s16, 0
      %p31 = por %p29, %p30
      %p32 = scmp.ne.s32.totalorder %s24, %s26
      %p33 = scmp.eq.s32.totalorder %s21, 3
      %p34 = por %p32, %p33
      %p35 = scmp.ne.s32.totalorder %s26, %s27
      %p36 = scmp.eq.s32.totalorder %s21, 0
      %p37 = por %p35, %p36
      %p38 = scmp.ne.s32.totalorder %s26, %s27
      %p39 = scmp.eq.s32.totalorder %s22, 3
      %p40 = por %p38, %p39
      %p42 = scmp.ne.s32.totalorder %s27, %s41
      %p43 = scmp.eq.s32.totalorder %s22, 0
      %p44 = por %p42, %p43
      %s46 = sadd.s32 %s45, 1
      %p49 = scmp.eq.s32.totalorder %s16, 3
      %p50 = scmp.ne.s32.totalorder %s45, %s47
      %p51 = scmp.eq.s32.totalorder %s16, 0
      %p52 = por %p50, %p51
      %p53 = scmp.ne.s32.totalorder %s45, %s47
      %p54 = scmp.eq.s32.totalorder %s21, 3
      %p55 = por %p53, %p54
      %p56 = scmp.ne.s32.totalorder %s47, %s48
      %p57 = scmp.eq.s32.totalorder %s21, 0
      %p58 = por %p56, %p57
      %p59 = scmp.ne.s32.totalorder %s47, %s48
      %p60 = scmp.eq.s32.totalorder %s22, 3
      %p61 = por %p59, %p60
      %p63 = scmp.ne.s32.totalorder %s48, %s62
      %p64 = scmp.eq.s32.totalorder %s22, 0
      %p65 = por %p63, %p64
      %s66 = ssub.s32 %s16, %s23
      %p67 = scmp.eq.s32.totalorder %s66, 0
      %s69 = sadd.s32 %s68, 1
      %s70 = scalar_select %p67, %s68, %s69
      %p73 = pneg %p67
      %p74 = scmp.eq.s32.totalorder %s16, 3
      %p75 = por %p73, %p74
      %p76 = scmp.ne.s32.totalorder %s68, %s71
      %p77 = scmp.eq.s32.totalorder %s16, 0
      %p78 = por %p76, %p77
      %p79 = scmp.ne.s32.totalorder %s68, %s71
      %p80 = scmp.eq.s32.totalorder %s21, 3
      %p81 = por %p79, %p80
      %p82 = scmp.ne.s32.totalorder %s71, %s72
      %p83 = scmp.eq.s32.totalorder %s21, 0
      %p84 = por %p82, %p83
      %p85 = scmp.ne.s32.totalorder %s71, %s72
      %p86 = scmp.eq.s32.totalorder %s22, 3
      %p87 = por %p85, %p86
      %p89 = scmp.ne.s32.totalorder %s72, %s88
      %p90 = scmp.eq.s32.totalorder %s22, 0
      %p91 = por %p89, %p90
      %s92 = ssub.s32 %s16, %s23
      %p93 = scmp.eq.s32.totalorder %s92, 0
      %s95 = sadd.s32 %s94, 1
      %s96 = scalar_select %p93, %s94, %s95
      %p99 = pneg %p93
      %p100 = scmp.eq.s32.totalorder %s16, 3
      %p101 = por %p99, %p100
      %p102 = scmp.ne.s32.totalorder %s94, %s97
      %p103 = scmp.eq.s32.totalorder %s16, 0
      %p104 = por %p102, %p103
      %p105 = scmp.ne.s32.totalorder %s94, %s97
      %p106 = scmp.eq.s32.totalorder %s21, 3
      %p107 = por %p105, %p106
      %p108 = scmp.ne.s32.totalorder %s97, %s98
      %p109 = scmp.eq.s32.totalorder %s21, 0
      %p110 = por %p108, %p109
      %p111 = scmp.ne.s32.totalorder %s97, %s98
      %p112 = scmp.eq.s32.totalorder %s22, 3
      %p113 = por %p111, %p112
      %p115 = scmp.ne.s32.totalorder %s98, %s114
      %p116 = scmp.eq.s32.totalorder %s22, 0
      %p117 = por %p115, %p116
      %p118 = scmp.le.s32.totalorder 1, %s16
      %p119 = scmp.lt.s32.totalorder %s16, 5
      %p120 = pnand %p118, %p119
      %p121 = pneg %p120
      // Predicated region
      $region9: #{tpu_custom_call.1} parent=5 // pred_check
        _
      $region10: #{tpu_custom_call.1} parent=5 // pred_check_branch
        %123 = sbr.rel (%p120) target = $region12
      $region11: #{tpu_custom_call.1} parent=5 // pred_region
        %s124 = ssub.s32 %s16, 1
        // Predicated region
        $region13: #{tpu_custom_call.1} parent=11 // pred_check
          %p125 = pneg %p37
        $region14: #{tpu_custom_call.1} parent=11 // pred_check_branch
          %127 = sbr.rel (%p125) target = $region16
        $region15: #{tpu_custom_call.1} parent=11 // pred_region
          _
        $region16: #{tpu_custom_call.1} parent=11 // pred_fallthru
          _
        // Predicated region
        $region17: #{tpu_custom_call.1} parent=11 // pred_check
          %p128 = pneg %p58
        $region18: #{tpu_custom_call.1} parent=11 // pred_check_branch
          %130 = sbr.rel (%p128) target = $region20
        $region19: #{tpu_custom_call.1} parent=11 // pred_region
          %s132 = ssub.s32 512, 512
          %133 = vsyncadd [#allocation3], %s132
          %s134 = sshll.u32 [#allocation2], 4
          %s135 = int_to_ptr.vmem [resolvable:$true] %s134
          %140 = dma.hbm_to_vmem [thread:$0]  %s1, 512, %s135, [#allocation3], 256, 256, 16
        $region20: #{tpu_custom_call.1} parent=11 // pred_fallthru
          _
      $region12: #{tpu_custom_call.1} parent=5 // pred_fallthru
        _
      %p141 = scmp.lt.s32.totalorder %s16, 4
      // Predicated region
      $region21: #{tpu_custom_call.1} parent=5 // pred_check
        %p142 = pneg %p141
      $region22: #{tpu_custom_call.1} parent=5 // pred_check_branch
        %144 = sbr.rel (%p142) target = $region24
      $region23: #{tpu_custom_call.1} parent=5 // pred_region
        // Predicated region
        $region25: #{tpu_custom_call.1} parent=23 // pred_check
          %p145 = pneg %p78
        $region26: #{tpu_custom_call.1} parent=23 // pred_check_branch
          %147 = sbr.rel (%p145) target = $region28
        $region27: #{tpu_custom_call.1} parent=23 // pred_region
          %s148 = sand.u32 %s68, 1
          %s149 = scalar_lea.sflag [#allocation6], %s148
          %s150 = sand.u32 %s68, 1
          %s151 = smul.addr %s150, 32
          %s152 = scalar_lea.vmem [#allocation5], %s151
          %s153 = smul.u32 2, %s16
          %s155 = ssub.s32 512, 512
          %156 = vsyncadd %s149, %s155
          %s157 = smul.addr %s153, 2
          %s158 = smul.addr %s157, 128
          %s159 = scalar_lea.hbm %s2, %s158
          %s160 = sshll.u32 %s152, 4
          %s161 = int_to_ptr.vmem [resolvable:$true] %s160
          %166 = dma.hbm_to_vmem [thread:$0]  %s159, 512, %s161, %s149, 128, 128, 8
        $region28: #{tpu_custom_call.1} parent=23 // pred_fallthru
          _
      $region24: #{tpu_custom_call.1} parent=5 // pred_fallthru
        _
      %p167 = scmp.le.s32.totalorder 1, %s16
      %p168 = scmp.lt.s32.totalorder %s16, 5
      %p169 = pnand %p167, %p168
      %p170 = pneg %p169
      // Predicated region
      $region29: #{tpu_custom_call.1} parent=5 // pred_check
        _
      $region30: #{tpu_custom_call.1} parent=5 // pred_check_branch
        %172 = sbr.rel (%p169) target = $region32
      $region31: #{tpu_custom_call.1} parent=5 // pred_region
        %s173 = ssub.s32 %s16, 1
        // Predicated region
        $region33: #{tpu_custom_call.1} parent=31 // pred_check
          %p174 = pneg %p58
        $region34: #{tpu_custom_call.1} parent=31 // pred_check_branch
          %176 = sbr.rel (%p174) target = $region36
        $region35: #{tpu_custom_call.1} parent=31 // pred_region
          %177 = dma.done [#allocation3], 512
        $region36: #{tpu_custom_call.1} parent=31 // pred_fallthru
          _
        %s178 = sand.u32 %s71, 1
        %s179 = scalar_lea.sflag [#allocation6], %s178
        %s180 = sand.u32 %s71, 1
        %s181 = smul.addr %s180, 32
        %s182 = scalar_lea.vmem [#allocation5], %s181
        // Predicated region
        $region37: #{tpu_custom_call.1} parent=31 // pred_check
          %p183 = pneg %p84
        $region38: #{tpu_custom_call.1} parent=31 // pred_check_branch
          %185 = sbr.rel (%p183) target = $region40
        $region39: #{tpu_custom_call.1} parent=31 // pred_region
          %186 = dma.done %s179, 512
        $region40: #{tpu_custom_call.1} parent=31 // pred_fallthru
          _
        %p187 = pneg %p37
        %p188 = pneg %p34
        %p189 = pneg %p58
        %p190 = pneg %p55
        %s191 = sand.u32 %s71, 1
        %s192 = scalar_lea.sflag [#allocation6], %s191
        %s193 = sand.u32 %s71, 1
        %s194 = smul.addr %s193, 32
        %s195 = scalar_lea.vmem [#allocation5], %s194
        %p196 = pneg %p84
        %p197 = pneg %p81
        %p198 = pneg %p110
        %p199 = pneg %p107
        %s200 = sand.u32 %s97, 1
        %s201 = scalar_lea.sflag [#allocation4], %s200
        %s202 = sand.u32 %s97, 1
        %s203 = smul.addr %s202, 1024
        %s204 = scalar_lea.vmem [#allocation7], %s203
        %s205 = smul.u32 2, %s21
        %s206 = smul.u32 2, %s21
        %v207 = vld [vmem:[%s0] sm:$0xff]
        %v208 = vld [vmem:[%s0 + $0x8] sm:$0xff]
        %v209 = vld [vmem:[%s0 + $0x10] sm:$0xff]
        %v210 = vld [vmem:[%s0 + $0x18] sm:$0xff]
        %v211 = vld [vmem:[%s0 + $0x20] sm:$0xff]
        %v212 = vld [vmem:[%s0 + $0x28] sm:$0xff]
        %v213 = vld [vmem:[%s0 + $0x30] sm:$0xff]
        %v214 = vld [vmem:[%s0 + $0x38] sm:$0xff]
        %v215 = vld [vmem:[%s0 + $0x40] sm:$0xff]
        %v216 = vld [vmem:[%s0 + $0x48] sm:$0xff]
        %v217 = vld [vmem:[%s0 + $0x50] sm:$0xff]
        %v218 = vld [vmem:[%s0 + $0x58] sm:$0xff]
        %v219 = vld [vmem:[%s0 + $0x60] sm:$0xff]
        %v220 = vld [vmem:[%s0 + $0x68] sm:$0xff]
        %v221 = vld [vmem:[%s0 + $0x70] sm:$0xff]
        %v222 = vld [vmem:[%s0 + $0x78] sm:$0xff]
        %v223 = vld [vmem:[%s0 + $0x80] sm:$0xff]
        %v224 = vld [vmem:[%s0 + $0x88] sm:$0xff]
        %v225 = vld [vmem:[%s0 + $0x90] sm:$0xff]
        %v226 = vld [vmem:[%s0 + $0x98] sm:$0xff]
        %v227 = vld [vmem:[%s0 + $0xa0] sm:$0xff]
        %v228 = vld [vmem:[%s0 + $0xa8] sm:$0xff]
        %v229 = vld [vmem:[%s0 + $0xb0] sm:$0xff]
        %v230 = vld [vmem:[%s0 + $0xb8] sm:$0xff]
        %v231 = vld [vmem:[%s0 + $0xc0] sm:$0xff]
        %v232 = vld [vmem:[%s0 + $0xc8] sm:$0xff]
        %v233 = vld [vmem:[%s0 + $0xd0] sm:$0xff]
        %v234 = vld [vmem:[%s0 + $0xd8] sm:$0xff]
        %v235 = vld [vmem:[%s0 + $0xe0] sm:$0xff]
        %v236 = vld [vmem:[%s0 + $0xe8] sm:$0xff]
        %v237 = vld [vmem:[%s0 + $0xf0] sm:$0xff]
        %v238 = vld [vmem:[%s0 + $0xf8] sm:$0xff]
        %v239 = vld [vmem:[%s182] sm:$0xff]
        %v240 = vld [vmem:[%s182 + $0x8] sm:$0xff]
        %vm241 = vcmask 130048
        %v243 = vsel %vm241, %v207, 0
        %v246 = vsel %vm241, %v208, 0
        %v249 = vsel %vm241, %v209, 0
        %v252 = vsel %vm241, %v210, 0
        %v255 = vsel %vm241, %v211, 0
        %v258 = vsel %vm241, %v212, 0
        %v261 = vsel %vm241, %v213, 0
        %v264 = vsel %vm241, %v214, 0
        %v267 = vsel %vm241, %v215, 0
        %v270 = vsel %vm241, %v216, 0
        %v273 = vsel %vm241, %v217, 0
        %v276 = vsel %vm241, %v218, 0
        %v279 = vsel %vm241, %v219, 0
        %v282 = vsel %vm241, %v220, 0
        %v285 = vsel %vm241, %v221, 0
        %v288 = vsel %vm241, %v222, 0
        %v291 = vsel %vm241, %v223, 0
        %v294 = vsel %vm241, %v224, 0
        %v297 = vsel %vm241, %v225, 0
        %v300 = vsel %vm241, %v226, 0
        %v303 = vsel %vm241, %v227, 0
        %v306 = vsel %vm241, %v228, 0
        %v309 = vsel %vm241, %v229, 0
        %v312 = vsel %vm241, %v230, 0
        %v315 = vsel %vm241, %v231, 0
        %v318 = vsel %vm241, %v232, 0
        %v321 = vsel %vm241, %v233, 0
        %v324 = vsel %vm241, %v234, 0
        %v327 = vsel %vm241, %v235, 0
        %v330 = vsel %vm241, %v236, 0
        %v333 = vsel %vm241, %v237, 0
        %v336 = vsel %vm241, %v238, 0
        %338 = vmatprep.subr.mxu0 0.0
        %339 = vmatpush1.msra.mxu0 %v239
        %340 = vmatprep.subr.mxu0 0.0
        %341 = vmatpush1.msra.mxu0 %v240
        %342 = vmatprep.subr.mxu0 0.0
        %343 = vmatpush1.msra.mxu0 0.0
        %344 = vmatprep.subr.mxu0 0.0
        %345 = vmatpush1.msra.mxu0 0.0
        %346 = vmatprep.subr.mxu0 0.0
        %347 = vmatpush1.msra.mxu0 0.0
        %348 = vmatprep.subr.mxu0 0.0
        %349 = vmatpush1.msra.mxu0 0.0
        %350 = vmatprep.subr.mxu0 0.0
        %351 = vmatpush1.msra.mxu0 0.0
        %352 = vmatprep.subr.mxu0 0.0
        %353 = vmatpush1.msra.mxu0 0.0
        %354 = vmatprep.subr.mxu0 0.0
        %355 = vmatpush1.msra.mxu0 0.0
        %356 = vmatprep.subr.mxu0 0.0
        %357 = vmatpush1.msra.mxu0 0.0
        %358 = vmatprep.subr.mxu0 0.0
        %359 = vmatpush1.msra.mxu0 0.0
        %360 = vmatprep.subr.mxu0 0.0
        %361 = vmatpush1.msra.mxu0 0.0
        %362 = vmatprep.subr.mxu0 0.0
        %363 = vmatpush1.msra.mxu0 0.0
        %364 = vmatprep.subr.mxu0 0.0
        %365 = vmatpush1.msra.mxu0 0.0
        %366 = vmatprep.subr.mxu0 0.0
        %367 = vmatpush1.msra.mxu0 0.0
        %368 = vmatprep.subr.mxu0 0.0
        %369 = vmatpush1.msra.mxu0 0.0
        %370 = vmatprep.subr.mxu0 0.0
        %371 = vmatpush1.msra.mxu0 0.0
        %372 = vmatprep.subr.mxu0 0.0
        %373 = vmatpush1.msra.mxu0 0.0
        %374 = vmatprep.subr.mxu0 0.0
        %375 = vmatpush1.msra.mxu0 0.0
        %376 = vmatprep.subr.mxu0 0.0
        %377 = vmatpush1.msra.mxu0 0.0
        %378 = vmatprep.subr.mxu0 0.0
        %379 = vmatpush1.msra.mxu0 0.0
        %380 = vmatprep.subr.mxu0 0.0
        %381 = vmatpush1.msra.mxu0 0.0
        %382 = vmatprep.subr.mxu0 0.0
        %383 = vmatpush1.msra.mxu0 0.0
        %384 = vmatprep.subr.mxu0 0.0
        %385 = vmatpush1.msra.mxu0 0.0
        %386 = vmatprep.subr.mxu0 0.0
        %387 = vmatpush1.msra.mxu0 0.0
        %388 = vmatprep.subr.mxu0 0.0
        %389 = vmatpush1.msra.mxu0 0.0
        %390 = vmatprep.subr.mxu0 0.0
        %391 = vmatpush1.msra.mxu0 0.0
        %392 = vmatprep.subr.mxu0 0.0
        %393 = vmatpush1.msra.mxu0 0.0
        %394 = vmatprep.subr.mxu0 0.0
        %395 = vmatpush1.msra.mxu0 0.0
        %396 = vmatprep.subr.mxu0 0.0
        %397 = vmatpush1.msra.mxu0 0.0
        %398 = vmatprep.subr.mxu0 0.0
        %399 = vmatpush1.msra.mxu0 0.0
        %400 = vmatprep.subr.mxu0 0.0
        %401 = vmatpush1.msra.mxu0 0.0
        %402 = vmatprep.mubr.f32.mxu0 0.0
        %403 = vmatmul.mubr.f32.gmra.mrb[0].mxu0 %v243
        %v404 = vpop.f32.mrb[0].mxu0
        %v405 = vadd.f32 0.0, %v404
        %v406 = vpop.f32.mrb[0].mxu0
        %407 = vmatprep.mubr.f32.mxu0 0.0
        %408 = vmatmul.mubr.f32.gmra.mrb[0].mxu0 %v246
        %v409 = vpop.f32.mrb[0].mxu0
        %v410 = vadd.f32 0.0, %v409
        %v411 = vpop.f32.mrb[0].mxu0
        %412 = vmatprep.mubr.f32.mxu0 0.0
        %413 = vmatmul.mubr.f32.gmra.mrb[0].mxu0 %v249
        %v414 = vpop.f32.mrb[0].mxu0
        %v415 = vadd.f32 0.0, %v414
        %v416 = vpop.f32.mrb[0].mxu0
        %417 = vmatprep.mubr.f32.mxu0 0.0
        %418 = vmatmul.mubr.f32.gmra.mrb[0].mxu0 %v252
        %v419 = vpop.f32.mrb[0].mxu0
        %v420 = vadd.f32 0.0, %v419
        %v421 = vpop.f32.mrb[0].mxu0
        %422 = vmatprep.mubr.f32.mxu0 0.0
        %423 = vmatmul.mubr.f32.gmra.mrb[0].mxu0 %v255
        %v424 = vpop.f32.mrb[0].mxu0
        %v425 = vadd.f32 0.0, %v424
        %v426 = vpop.f32.mrb[0].mxu0
        %427 = vmatprep.mubr.f32.mxu0 0.0
        %428 = vmatmul.mubr.f32.gmra.mrb[0].mxu0 %v258
        %v429 = vpop.f32.mrb[0].mxu0
        %v430 = vadd.f32 0.0, %v429
        %v431 = vpop.f32.mrb[0].mxu0
        %432 = vmatprep.mubr.f32.mxu0 0.0
        %433 = vmatmul.mubr.f32.gmra.mrb[0].mxu0 %v261
        %v434 = vpop.f32.mrb[0].mxu0
        %v435 = vadd.f32 0.0, %v434
        %v436 = vpop.f32.mrb[0].mxu0
        %437 = vmatprep.mubr.f32.mxu0 0.0
        %438 = vmatmul.mubr.f32.gmra.mrb[0].mxu0 %v264
        %v439 = vpop.f32.mrb[0].mxu0
        %v440 = vadd.f32 0.0, %v439
        %v441 = vpop.f32.mrb[0].mxu0
        %442 = vmatprep.mubr.f32.mxu0 0.0
        %443 = vmatmul.mubr.f32.gmra.mrb[0].mxu0 %v267
        %v444 = vpop.f32.mrb[0].mxu0
        %v445 = vadd.f32 0.0, %v444
        %v446 = vpop.f32.mrb[0].mxu0
        %447 = vmatprep.mubr.f32.mxu0 0.0
        %448 = vmatmul.mubr.f32.gmra.mrb[0].mxu0 %v270
        %v449 = vpop.f32.mrb[0].mxu0
        %v450 = vadd.f32 0.0, %v449
        %v451 = vpop.f32.mrb[0].mxu0
        %452 = vmatprep.mubr.f32.mxu0 0.0
        %453 = vmatmul.mubr.f32.gmra.mrb[0].mxu0 %v273
        %v454 = vpop.f32.mrb[0].mxu0
        %v455 = vadd.f32 0.0, %v454
        %v456 = vpop.f32.mrb[0].mxu0
        %457 = vmatprep.mubr.f32.mxu0 0.0
        %458 = vmatmul.mubr.f32.gmra.mrb[0].mxu0 %v276
        %v459 = vpop.f32.mrb[0].mxu0
        %v460 = vadd.f32 0.0, %v459
        %v461 = vpop.f32.mrb[0].mxu0
        %462 = vmatprep.mubr.f32.mxu0 0.0
        %463 = vmatmul.mubr.f32.gmra.mrb[0].mxu0 %v279
        %v464 = vpop.f32.mrb[0].mxu0
        %v465 = vadd.f32 0.0, %v464
        %v466 = vpop.f32.mrb[0].mxu0
        %467 = vmatprep.mubr.f32.mxu0 0.0
        %468 = vmatmul.mubr.f32.gmra.mrb[0].mxu0 %v282
        %v469 = vpop.f32.mrb[0].mxu0
        %v470 = vadd.f32 0.0, %v469
        %v471 = vpop.f32.mrb[0].mxu0
        %472 = vmatprep.mubr.f32.mxu0 0.0
        %473 = vmatmul.mubr.f32.gmra.mrb[0].mxu0 %v285
        %v474 = vpop.f32.mrb[0].mxu0
        %v475 = vadd.f32 0.0, %v474
        %v476 = vpop.f32.mrb[0].mxu0
        %477 = vmatprep.mubr.f32.mxu0 0.0
        %478 = vmatmul.mubr.f32.gmra.mrb[0].mxu0 %v288
        %v479 = vpop.f32.mrb[0].mxu0
        %v480 = vadd.f32 0.0, %v479
        %v481 = vpop.f32.mrb[0].mxu0
        %482 = vmatprep.mubr.f32.mxu0 0.0
        %483 = vmatmul.mubr.f32.gmra.mrb[0].mxu0 %v291
        %v484 = vpop.f32.mrb[0].mxu0
        %v485 = vadd.f32 0.0, %v484
        %v486 = vpop.f32.mrb[0].mxu0
        %487 = vmatprep.mubr.f32.mxu0 0.0
        %488 = vmatmul.mubr.f32.gmra.mrb[0].mxu0 %v294
        %v489 = vpop.f32.mrb[0].mxu0
        %v490 = vadd.f32 0.0, %v489
        %v491 = vpop.f32.mrb[0].mxu0
        %492 = vmatprep.mubr.f32.mxu0 0.0
        %493 = vmatmul.mubr.f32.gmra.mrb[0].mxu0 %v297
        %v494 = vpop.f32.mrb[0].mxu0
        %v495 = vadd.f32 0.0, %v494
        %v496 = vpop.f32.mrb[0].mxu0
        %497 = vmatprep.mubr.f32.mxu0 0.0
        %498 = vmatmul.mubr.f32.gmra.mrb[0].mxu0 %v300
        %v499 = vpop.f32.mrb[0].mxu0
        %v500 = vadd.f32 0.0, %v499
        %v501 = vpop.f32.mrb[0].mxu0
        %502 = vmatprep.mubr.f32.mxu0 0.0
        %503 = vmatmul.mubr.f32.gmra.mrb[0].mxu0 %v303
        %v504 = vpop.f32.mrb[0].mxu0
        %v505 = vadd.f32 0.0, %v504
        %v506 = vpop.f32.mrb[0].mxu0
        %507 = vmatprep.mubr.f32.mxu0 0.0
        %508 = vmatmul.mubr.f32.gmra.mrb[0].mxu0 %v306
        %v509 = vpop.f32.mrb[0].mxu0
        %v510 = vadd.f32 0.0, %v509
        %v511 = vpop.f32.mrb[0].mxu0
        %512 = vmatprep.mubr.f32.mxu0 0.0
        %513 = vmatmul.mubr.f32.gmra.mrb[0].mxu0 %v309
        %v514 = vpop.f32.mrb[0].mxu0
        %v515 = vadd.f32 0.0, %v514
        %v516 = vpop.f32.mrb[0].mxu0
        %517 = vmatprep.mubr.f32.mxu0 0.0
        %518 = vmatmul.mubr.f32.gmra.mrb[0].mxu0 %v312
        %v519 = vpop.f32.mrb[0].mxu0
        %v520 = vadd.f32 0.0, %v519
        %v521 = vpop.f32.mrb[0].mxu0
        %522 = vmatprep.mubr.f32.mxu0 0.0
        %523 = vmatmul.mubr.f32.gmra.mrb[0].mxu0 %v315
        %v524 = vpop.f32.mrb[0].mxu0
        %v525 = vadd.f32 0.0, %v524
        %v526 = vpop.f32.mrb[0].mxu0
        %527 = vmatprep.mubr.f32.mxu0 0.0
        %528 = vmatmul.mubr.f32.gmra.mrb[0].mxu0 %v318
        %v529 = vpop.f32.mrb[0].mxu0
        %v530 = vadd.f32 0.0, %v529
        %v531 = vpop.f32.mrb[0].mxu0
        %532 = vmatprep.mubr.f32.mxu0 0.0
        %533 = vmatmul.mubr.f32.gmra.mrb[0].mxu0 %v321
        %v534 = vpop.f32.mrb[0].mxu0
        %v535 = vadd.f32 0.0, %v534
        %v536 = vpop.f32.mrb[0].mxu0
        %537 = vmatprep.mubr.f32.mxu0 0.0
        %538 = vmatmul.mubr.f32.gmra.mrb[0].mxu0 %v324
        %v539 = vpop.f32.mrb[0].mxu0
        %v540 = vadd.f32 0.0, %v539
        %v541 = vpop.f32.mrb[0].mxu0
        %542 = vmatprep.mubr.f32.mxu0 0.0
        %543 = vmatmul.mubr.f32.gmra.mrb[0].mxu0 %v327
        %v544 = vpop.f32.mrb[0].mxu0
        %v545 = vadd.f32 0.0, %v544
        %v546 = vpop.f32.mrb[0].mxu0
        %547 = vmatprep.mubr.f32.mxu0 0.0
        %548 = vmatmul.mubr.f32.gmra.mrb[0].mxu0 %v330
        %v549 = vpop.f32.mrb[0].mxu0
        %v550 = vadd.f32 0.0, %v549
        %v551 = vpop.f32.mrb[0].mxu0
        %552 = vmatprep.mubr.f32.mxu0 0.0
        %553 = vmatmul.mubr.f32.gmra.mrb[0].mxu0 %v333
        %v554 = vpop.f32.mrb[0].mxu0
        %v555 = vadd.f32 0.0, %v554
        %v556 = vpop.f32.mrb[0].mxu0
        %557 = vmatprep.mubr.f32.mxu0 0.0
        %558 = vmatmul.mubr.f32.gmra.mrb[0].mxu0 %v336
        %v559 = vpop.f32.mrb[0].mxu0
        %v560 = vadd.f32 0.0, %v559
        %v561 = vpop.f32.mrb[0].mxu0
        %562 = vdwg.mxu0
        %s563 = scalar_lea.vmem %s182, 16 [#allocation5]
        %v564 = vld [vmem:[%s563] sm:$0xff]
        %v565 = vld [vmem:[%s563 + $0x8] sm:$0xff]
        %566 = vmatprep.subr.mxu0 0.0
        %567 = vmatpush1.msra.mxu0 %v564
        %568 = vmatprep.subr.mxu0 0.0
        %569 = vmatpush1.msra.mxu0 %v565
        %570 = vmatprep.subr.mxu0 0.0
        %571 = vmatpush1.msra.mxu0 0.0
        %572 = vmatprep.subr.mxu0 0.0
        %573 = vmatpush1.msra.mxu0 0.0
        %574 = vmatprep.subr.mxu0 0.0
        %575 = vmatpush1.msra.mxu0 0.0
        %576 = vmatprep.subr.mxu0 0.0
        %577 = vmatpush1.msra.mxu0 0.0
        %578 = vmatprep.subr.mxu0 0.0
        %579 = vmatpush1.msra.mxu0 0.0
        %580 = vmatprep.subr.mxu0 0.0
        %581 = vmatpush1.msra.mxu0 0.0
        %582 = vmatprep.subr.mxu0 0.0
        %583 = vmatpush1.msra.mxu0 0.0
        %584 = vmatprep.subr.mxu0 0.0
        %585 = vmatpush1.msra.mxu0 0.0
        %586 = vmatprep.subr.mxu0 0.0
        %587 = vmatpush1.msra.mxu0 0.0
        %588 = vmatprep.subr.mxu0 0.0
        %589 = vmatpush1.msra.mxu0 0.0
        %590 = vmatprep.subr.mxu0 0.0
        %591 = vmatpush1.msra.mxu0 0.0
        %592 = vmatprep.subr.mxu0 0.0
        %593 = vmatpush1.msra.mxu0 0.0
        %594 = vmatprep.subr.mxu0 0.0
        %595 = vmatpush1.msra.mxu0 0.0
        %596 = vmatprep.subr.mxu0 0.0
        %597 = vmatpush1.msra.mxu0 0.0
        %598 = vmatprep.subr.mxu0 0.0
        %599 = vmatpush1.msra.mxu0 0.0
        %600 = vmatprep.subr.mxu0 0.0
        %601 = vmatpush1.msra.mxu0 0.0
        %602 = vmatprep.subr.mxu0 0.0
        %603 = vmatpush1.msra.mxu0 0.0
        %604 = vmatprep.subr.mxu0 0.0
        %605 = vmatpush1.msra.mxu0 0.0
        %606 = vmatprep.subr.mxu0 0.0
        %607 = vmatpush1.msra.mxu0 0.0
        %608 = vmatprep.subr.mxu0 0.0
        %609 = vmatpush1.msra.mxu0 0.0
        %610 = vmatprep.subr.mxu0 0.0
        %611 = vmatpush1.msra.mxu0 0.0
        %612 = vmatprep.subr.mxu0 0.0
        %613 = vmatpush1.msra.mxu0 0.0
        %614 = vmatprep.subr.mxu0 0.0
        %615 = vmatpush1.msra.mxu0 0.0
        %616 = vmatprep.subr.mxu0 0.0
        %617 = vmatpush1.msra.mxu0 0.0
        %618 = vmatprep.subr.mxu0 0.0
        %619 = vmatpush1.msra.mxu0 0.0
        %620 = vmatprep.subr.mxu0 0.0
        %621 = vmatpush1.msra.mxu0 0.0
        %622 = vmatprep.subr.mxu0 0.0
        %623 = vmatpush1.msra.mxu0 0.0
        %624 = vmatprep.subr.mxu0 0.0
        %625 = vmatpush1.msra.mxu0 0.0
        %626 = vmatprep.subr.mxu0 0.0
        %627 = vmatpush1.msra.mxu0 0.0
        %628 = vmatprep.subr.mxu0 0.0
        %629 = vmatpush1.msra.mxu0 0.0
        %630 = vmatprep.mubr.f32.mxu0 0.0
        %631 = vmatmul.mubr.f32.gmra.mrb[0].mxu0 %v243
        %v632 = vpop.f32.mrb[0].mxu0
        %v633 = vadd.f32 0.0, %v632
        %v634 = vpop.f32.mrb[0].mxu0
        %635 = vmatprep.mubr.f32.mxu0 0.0
        %636 = vmatmul.mubr.f32.gmra.mrb[0].mxu0 %v246
        %v637 = vpop.f32.mrb[0].mxu0
        %v638 = vadd.f32 0.0, %v637
        %v639 = vpop.f32.mrb[0].mxu0
        %640 = vmatprep.mubr.f32.mxu0 0.0
        %641 = vmatmul.mubr.f32.gmra.mrb[0].mxu0 %v249
        %v642 = vpop.f32.mrb[0].mxu0
        %v643 = vadd.f32 0.0, %v642
        %v644 = vpop.f32.mrb[0].mxu0
        %645 = vmatprep.mubr.f32.mxu0 0.0
        %646 = vmatmul.mubr.f32.gmra.mrb[0].mxu0 %v252
        %v647 = vpop.f32.mrb[0].mxu0
        %v648 = vadd.f32 0.0, %v647
        %v649 = vpop.f32.mrb[0].mxu0
        %650 = vmatprep.mubr.f32.mxu0 0.0
        %651 = vmatmul.mubr.f32.gmra.mrb[0].mxu0 %v255
        %v652 = vpop.f32.mrb[0].mxu0
        %v653 = vadd.f32 0.0, %v652
        %v654 = vpop.f32.mrb[0].mxu0
        %655 = vmatprep.mubr.f32.mxu0 0.0
        %656 = vmatmul.mubr.f32.gmra.mrb[0].mxu0 %v258
        %v657 = vpop.f32.mrb[0].mxu0
        %v658 = vadd.f32 0.0, %v657
        %v659 = vpop.f32.mrb[0].mxu0
        %660 = vmatprep.mubr.f32.mxu0 0.0
        %661 = vmatmul.mubr.f32.gmra.mrb[0].mxu0 %v261
        %v662 = vpop.f32.mrb[0].mxu0
        %v663 = vadd.f32 0.0, %v662
        %v664 = vpop.f32.mrb[0].mxu0
        %665 = vmatprep.mubr.f32.mxu0 0.0
        %666 = vmatmul.mubr.f32.gmra.mrb[0].mxu0 %v264
        %v667 = vpop.f32.mrb[0].mxu0
        %v668 = vadd.f32 0.0, %v667
        %v669 = vpop.f32.mrb[0].mxu0
        %670 = vmatprep.mubr.f32.mxu0 0.0
        %671 = vmatmul.mubr.f32.gmra.mrb[0].mxu0 %v267
        %v672 = vpop.f32.mrb[0].mxu0
        %v673 = vadd.f32 0.0, %v672
        %v674 = vpop.f32.mrb[0].mxu0
        %675 = vmatprep.mubr.f32.mxu0 0.0
        %676 = vmatmul.mubr.f32.gmra.mrb[0].mxu0 %v270
        %v677 = vpop.f32.mrb[0].mxu0
        %v678 = vadd.f32 0.0, %v677
        %v679 = vpop.f32.mrb[0].mxu0
        %680 = vmatprep.mubr.f32.mxu0 0.0
        %681 = vmatmul.mubr.f32.gmra.mrb[0].mxu0 %v273
        %v682 = vpop.f32.mrb[0].mxu0
        %v683 = vadd.f32 0.0, %v682
        %v684 = vpop.f32.mrb[0].mxu0
        %685 = vmatprep.mubr.f32.mxu0 0.0
        %686 = vmatmul.mubr.f32.gmra.mrb[0].mxu0 %v276
        %v687 = vpop.f32.mrb[0].mxu0
        %v688 = vadd.f32 0.0, %v687
        %v689 = vpop.f32.mrb[0].mxu0
        %690 = vmatprep.mubr.f32.mxu0 0.0
        %691 = vmatmul.mubr.f32.gmra.mrb[0].mxu0 %v279
        %v692 = vpop.f32.mrb[0].mxu0
        %v693 = vadd.f32 0.0, %v692
        %v694 = vpop.f32.mrb[0].mxu0
        %695 = vmatprep.mubr.f32.mxu0 0.0
        %696 = vmatmul.mubr.f32.gmra.mrb[0].mxu0 %v282
        %v697 = vpop.f32.mrb[0].mxu0
        %v698 = vadd.f32 0.0, %v697
        %v699 = vpop.f32.mrb[0].mxu0
        %700 = vmatprep.mubr.f32.mxu0 0.0
        %701 = vmatmul.mubr.f32.gmra.mrb[0].mxu0 %v285
        %v702 = vpop.f32.mrb[0].mxu0
        %v703 = vadd.f32 0.0, %v702
        %v704 = vpop.f32.mrb[0].mxu0
        %705 = vmatprep.mubr.f32.mxu0 0.0
        %706 = vmatmul.mubr.f32.gmra.mrb[0].mxu0 %v288
        %v707 = vpop.f32.mrb[0].mxu0
        %v708 = vadd.f32 0.0, %v707
        %v709 = vpop.f32.mrb[0].mxu0
        %710 = vmatprep.mubr.f32.mxu0 0.0
        %711 = vmatmul.mubr.f32.gmra.mrb[0].mxu0 %v291
        %v712 = vpop.f32.mrb[0].mxu0
        %v713 = vadd.f32 0.0, %v712
        %v714 = vpop.f32.mrb[0].mxu0
        %715 = vmatprep.mubr.f32.mxu0 0.0
        %716 = vmatmul.mubr.f32.gmra.mrb[0].mxu0 %v294
        %v717 = vpop.f32.mrb[0].mxu0
        %v718 = vadd.f32 0.0, %v717
        %v719 = vpop.f32.mrb[0].mxu0
        %720 = vmatprep.mubr.f32.mxu0 0.0
        %721 = vmatmul.mubr.f32.gmra.mrb[0].mxu0 %v297
        %v722 = vpop.f32.mrb[0].mxu0
        %v723 = vadd.f32 0.0, %v722
        %v724 = vpop.f32.mrb[0].mxu0
        %725 = vmatprep.mubr.f32.mxu0 0.0
        %726 = vmatmul.mubr.f32.gmra.mrb[0].mxu0 %v300
        %v727 = vpop.f32.mrb[0].mxu0
        %v728 = vadd.f32 0.0, %v727
        %v729 = vpop.f32.mrb[0].mxu0
        %730 = vmatprep.mubr.f32.mxu0 0.0
        %731 = vmatmul.mubr.f32.gmra.mrb[0].mxu0 %v303
        %v732 = vpop.f32.mrb[0].mxu0
        %v733 = vadd.f32 0.0, %v732
        %v734 = vpop.f32.mrb[0].mxu0
        %735 = vmatprep.mubr.f32.mxu0 0.0
        %736 = vmatmul.mubr.f32.gmra.mrb[0].mxu0 %v306
        %v737 = vpop.f32.mrb[0].mxu0
        %v738 = vadd.f32 0.0, %v737
        %v739 = vpop.f32.mrb[0].mxu0
        %740 = vmatprep.mubr.f32.mxu0 0.0
        %741 = vmatmul.mubr.f32.gmra.mrb[0].mxu0 %v309
        %v742 = vpop.f32.mrb[0].mxu0
        %v743 = vadd.f32 0.0, %v742
        %v744 = vpop.f32.mrb[0].mxu0
        %745 = vmatprep.mubr.f32.mxu0 0.0
        %746 = vmatmul.mubr.f32.gmra.mrb[0].mxu0 %v312
        %v747 = vpop.f32.mrb[0].mxu0
        %v748 = vadd.f32 0.0, %v747
        %v749 = vpop.f32.mrb[0].mxu0
        %750 = vmatprep.mubr.f32.mxu0 0.0
        %751 = vmatmul.mubr.f32.gmra.mrb[0].mxu0 %v315
        %v752 = vpop.f32.mrb[0].mxu0
        %v753 = vadd.f32 0.0, %v752
        %v754 = vpop.f32.mrb[0].mxu0
        %755 = vmatprep.mubr.f32.mxu0 0.0
        %756 = vmatmul.mubr.f32.gmra.mrb[0].mxu0 %v318
        %v757 = vpop.f32.mrb[0].mxu0
        %v758 = vadd.f32 0.0, %v757
        %v759 = vpop.f32.mrb[0].mxu0
        %760 = vmatprep.mubr.f32.mxu0 0.0
        %761 = vmatmul.mubr.f32.gmra.mrb[0].mxu0 %v321
        %v762 = vpop.f32.mrb[0].mxu0
        %v763 = vadd.f32 0.0, %v762
        %v764 = vpop.f32.mrb[0].mxu0
        %765 = vmatprep.mubr.f32.mxu0 0.0
        %766 = vmatmul.mubr.f32.gmra.mrb[0].mxu0 %v324
        %v767 = vpop.f32.mrb[0].mxu0
        %v768 = vadd.f32 0.0, %v767
        %v769 = vpop.f32.mrb[0].mxu0
        %770 = vmatprep.mubr.f32.mxu0 0.0
        %771 = vmatmul.mubr.f32.gmra.mrb[0].mxu0 %v327
        %v772 = vpop.f32.mrb[0].mxu0
        %v773 = vadd.f32 0.0, %v772
        %v774 = vpop.f32.mrb[0].mxu0
        %775 = vmatprep.mubr.f32.mxu0 0.0
        %776 = vmatmul.mubr.f32.gmra.mrb[0].mxu0 %v330
        %v777 = vpop.f32.mrb[0].mxu0
        %v778 = vadd.f32 0.0, %v777
        %v779 = vpop.f32.mrb[0].mxu0
        %780 = vmatprep.mubr.f32.mxu0 0.0
        %781 = vmatmul.mubr.f32.gmra.mrb[0].mxu0 %v333
        %v782 = vpop.f32.mrb[0].mxu0
        %v783 = vadd.f32 0.0, %v782
        %v784 = vpop.f32.mrb[0].mxu0
        %785 = vmatprep.mubr.f32.mxu0 0.0
        %786 = vmatmul.mubr.f32.gmra.mrb[0].mxu0 %v336
        %v787 = vpop.f32.mrb[0].mxu0
        %v788 = vadd.f32 0.0, %v787
        %v789 = vpop.f32.mrb[0].mxu0
        %790 = vdwg.mxu0
        %v791 = vld [vmem:[#allocation2] sm:$0xff]
        %v792 = vld [vmem:[#allocation2 + $0x8] sm:$0xff]
        %v793 = vld [vmem:[#allocation2 + $0x10] sm:$0xff]
        %v794 = vld [vmem:[#allocation2 + $0x18] sm:$0xff]
        %v796 = vsel %vm241, %v405, 0
        %v799 = vsel %vm241, %v410, 0
        %v802 = vsel %vm241, %v415, 0
        %v805 = vsel %vm241, %v420, 0
        %v808 = vsel %vm241, %v425, 0
        %v811 = vsel %vm241, %v430, 0
        %v814 = vsel %vm241, %v435, 0
        %v817 = vsel %vm241, %v440, 0
        %v820 = vsel %vm241, %v445, 0
        %v823 = vsel %vm241, %v450, 0
        %v826 = vsel %vm241, %v455, 0
        %v829 = vsel %vm241, %v460, 0
        %v832 = vsel %vm241, %v465, 0
        %v835 = vsel %vm241, %v470, 0
        %v838 = vsel %vm241, %v475, 0
        %v841 = vsel %vm241, %v480, 0
        %v844 = vsel %vm241, %v485, 0
        %v847 = vsel %vm241, %v490, 0
        %v850 = vsel %vm241, %v495, 0
        %v853 = vsel %vm241, %v500, 0
        %v856 = vsel %vm241, %v505, 0
        %v859 = vsel %vm241, %v510, 0
        %v862 = vsel %vm241, %v515, 0
        %v865 = vsel %vm241, %v520, 0
        %v868 = vsel %vm241, %v525, 0
        %v871 = vsel %vm241, %v530, 0
        %v874 = vsel %vm241, %v535, 0
        %v877 = vsel %vm241, %v540, 0
        %v880 = vsel %vm241, %v545, 0
        %v883 = vsel %vm241, %v550, 0
        %v886 = vsel %vm241, %v555, 0
        %v889 = vsel %vm241, %v560, 0
        %v892 = vsel %vm241, %v633, 0
        %v895 = vsel %vm241, %v638, 0
        %v898 = vsel %vm241, %v643, 0
        %v901 = vsel %vm241, %v648, 0
        %v904 = vsel %vm241, %v653, 0
        %v907 = vsel %vm241, %v658, 0
        %v910 = vsel %vm241, %v663, 0
        %v913 = vsel %vm241, %v668, 0
        %v916 = vsel %vm241, %v673, 0
        %v919 = vsel %vm241, %v678, 0
        %v922 = vsel %vm241, %v683, 0
        %v925 = vsel %vm241, %v688, 0
        %v928 = vsel %vm241, %v693, 0
        %v931 = vsel %vm241, %v698, 0
        %v934 = vsel %vm241, %v703, 0
        %v937 = vsel %vm241, %v708, 0
        %v940 = vsel %vm241, %v713, 0
        %v943 = vsel %vm241, %v718, 0
        %v946 = vsel %vm241, %v723, 0
        %v949 = vsel %vm241, %v728, 0
        %v952 = vsel %vm241, %v733, 0
        %v955 = vsel %vm241, %v738, 0
        %v958 = vsel %vm241, %v743, 0
        %v961 = vsel %vm241, %v748, 0
        %v964 = vsel %vm241, %v753, 0
        %v967 = vsel %vm241, %v758, 0
        %v970 = vsel %vm241, %v763, 0
        %v973 = vsel %vm241, %v768, 0
        %v976 = vsel %vm241, %v773, 0
        %v979 = vsel %vm241, %v778, 0
        %v982 = vsel %vm241, %v783, 0
        %v985 = vsel %vm241, %v788, 0
        %987 = vmatprep.subr.mxu0 %v792
        %988 = vmatpush1.msra.mxu0 %v791
        %989 = vmatprep.subr.mxu0 %v794
        %990 = vmatpush1.msra.mxu0 %v793
        %991 = vmatprep.subr.mxu0 0.0
        %992 = vmatpush1.msra.mxu0 0.0
        %993 = vmatprep.subr.mxu0 0.0
        %994 = vmatpush1.msra.mxu0 0.0
        %995 = vmatprep.subr.mxu0 0.0
        %996 = vmatpush1.msra.mxu0 0.0
        %997 = vmatprep.subr.mxu0 0.0
        %998 = vmatpush1.msra.mxu0 0.0
        %999 = vmatprep.subr.mxu0 0.0
        %1000 = vmatpush1.msra.mxu0 0.0
        %1001 = vmatprep.subr.mxu0 0.0
        %1002 = vmatpush1.msra.mxu0 0.0
        %1003 = vmatprep.subr.mxu0 0.0
        %1004 = vmatpush1.msra.mxu0 0.0
        %1005 = vmatprep.subr.mxu0 0.0
        %1006 = vmatpush1.msra.mxu0 0.0
        %1007 = vmatprep.subr.mxu0 0.0
        %1008 = vmatpush1.msra.mxu0 0.0
        %1009 = vmatprep.subr.mxu0 0.0
        %1010 = vmatpush1.msra.mxu0 0.0
        %1011 = vmatprep.subr.mxu0 0.0
        %1012 = vmatpush1.msra.mxu0 0.0
        %1013 = vmatprep.subr.mxu0 0.0
        %1014 = vmatpush1.msra.mxu0 0.0
        %1015 = vmatprep.subr.mxu0 0.0
        %1016 = vmatpush1.msra.mxu0 0.0
        %1017 = vmatprep.subr.mxu0 0.0
        %1018 = vmatpush1.msra.mxu0 0.0
        %1019 = vmatprep.subr.mxu0 0.0
        %1020 = vmatpush1.msra.mxu0 0.0
        %1021 = vmatprep.subr.mxu0 0.0
        %1022 = vmatpush1.msra.mxu0 0.0
        %1023 = vmatprep.subr.mxu0 0.0
        %1024 = vmatpush1.msra.mxu0 0.0
        %1025 = vmatprep.subr.mxu0 0.0
        %1026 = vmatpush1.msra.mxu0 0.0
        %1027 = vmatprep.subr.mxu0 0.0
        %1028 = vmatpush1.msra.mxu0 0.0
        %1029 = vmatprep.subr.mxu0 0.0
        %1030 = vmatpush1.msra.mxu0 0.0
        %1031 = vmatprep.subr.mxu0 0.0
        %1032 = vmatpush1.msra.mxu0 0.0
        %1033 = vmatprep.subr.mxu0 0.0
        %1034 = vmatpush1.msra.mxu0 0.0
        %1035 = vmatprep.subr.mxu0 0.0
        %1036 = vmatpush1.msra.mxu0 0.0
        %1037 = vmatprep.subr.mxu0 0.0
        %1038 = vmatpush1.msra.mxu0 0.0
        %1039 = vmatprep.subr.mxu0 0.0
        %1040 = vmatpush1.msra.mxu0 0.0
        %1041 = vmatprep.subr.mxu0 0.0
        %1042 = vmatpush1.msra.mxu0 0.0
        %1043 = vmatprep.subr.mxu0 0.0
        %1044 = vmatpush1.msra.mxu0 0.0
        %1045 = vmatprep.subr.mxu0 0.0
        %1046 = vmatpush1.msra.mxu0 0.0
        %1047 = vmatprep.subr.mxu0 0.0
        %1048 = vmatpush1.msra.mxu0 0.0
        %1049 = vmatprep.subr.mxu0 0.0
        %1050 = vmatpush1.msra.mxu0 0.0
        %1051 = vmatprep.mubr.f32.mxu0 0.0
        %1052 = vmatmul.mubr.f32.gmra.mrb[0].mxu0 %v796
        %v1053 = vpop.f32.mrb[0].mxu0
        %v1054 = vadd.f32 0.0, %v1053
        %v1055 = vpop.f32.mrb[0].mxu0
        %v1056 = vadd.f32 0.0, %v1055
        %1057 = vmatprep.mubr.f32.mxu0 0.0
        %1058 = vmatmul.mubr.f32.gmra.mrb[0].mxu0 %v799
        %v1059 = vpop.f32.mrb[0].mxu0
        %v1060 = vadd.f32 0.0, %v1059
        %v1061 = vpop.f32.mrb[0].mxu0
        %v1062 = vadd.f32 0.0, %v1061
        %1063 = vmatprep.mubr.f32.mxu0 0.0
        %1064 = vmatmul.mubr.f32.gmra.mrb[0].mxu0 %v802
        %v1065 = vpop.f32.mrb[0].mxu0
        %v1066 = vadd.f32 0.0, %v1065
        %v1067 = vpop.f32.mrb[0].mxu0
        %v1068 = vadd.f32 0.0, %v1067
        %1069 = vmatprep.mubr.f32.mxu0 0.0
        %1070 = vmatmul.mubr.f32.gmra.mrb[0].mxu0 %v805
        %v1071 = vpop.f32.mrb[0].mxu0
        %v1072 = vadd.f32 0.0, %v1071
        %v1073 = vpop.f32.mrb[0].mxu0
        %v1074 = vadd.f32 0.0, %v1073
        %1075 = vmatprep.mubr.f32.mxu0 0.0
        %1076 = vmatmul.mubr.f32.gmra.mrb[0].mxu0 %v808
        %v1077 = vpop.f32.mrb[0].mxu0
        %v1078 = vadd.f32 0.0, %v1077
        %v1079 = vpop.f32.mrb[0].mxu0
        %v1080 = vadd.f32 0.0, %v1079
        %1081 = vmatprep.mubr.f32.mxu0 0.0
        %1082 = vmatmul.mubr.f32.gmra.mrb[0].mxu0 %v811
        %v1083 = vpop.f32.mrb[0].mxu0
        %v1084 = vadd.f32 0.0, %v1083
        %v1085 = vpop.f32.mrb[0].mxu0
        %v1086 = vadd.f32 0.0, %v1085
        %1087 = vmatprep.mubr.f32.mxu0 0.0
        %1088 = vmatmul.mubr.f32.gmra.mrb[0].mxu0 %v814
        %v1089 = vpop.f32.mrb[0].mxu0
        %v1090 = vadd.f32 0.0, %v1089
        %v1091 = vpop.f32.mrb[0].mxu0
        %v1092 = vadd.f32 0.0, %v1091
        %1093 = vmatprep.mubr.f32.mxu0 0.0
        %1094 = vmatmul.mubr.f32.gmra.mrb[0].mxu0 %v817
        %v1095 = vpop.f32.mrb[0].mxu0
        %v1096 = vadd.f32 0.0, %v1095
        %v1097 = vpop.f32.mrb[0].mxu0
        %v1098 = vadd.f32 0.0, %v1097
        %1099 = vmatprep.mubr.f32.mxu0 0.0
        %1100 = vmatmul.mubr.f32.gmra.mrb[0].mxu0 %v820
        %v1101 = vpop.f32.mrb[0].mxu0
        %v1102 = vadd.f32 0.0, %v1101
        %v1103 = vpop.f32.mrb[0].mxu0
        %v1104 = vadd.f32 0.0, %v1103
        %1105 = vmatprep.mubr.f32.mxu0 0.0
        %1106 = vmatmul.mubr.f32.gmra.mrb[0].mxu0 %v823
        %v1107 = vpop.f32.mrb[0].mxu0
        %v1108 = vadd.f32 0.0, %v1107
        %v1109 = vpop.f32.mrb[0].mxu0
        %v1110 = vadd.f32 0.0, %v1109
        %1111 = vmatprep.mubr.f32.mxu0 0.0
        %1112 = vmatmul.mubr.f32.gmra.mrb[0].mxu0 %v826
        %v1113 = vpop.f32.mrb[0].mxu0
        %v1114 = vadd.f32 0.0, %v1113
        %v1115 = vpop.f32.mrb[0].mxu0
        %v1116 = vadd.f32 0.0, %v1115
        %1117 = vmatprep.mubr.f32.mxu0 0.0
        %1118 = vmatmul.mubr.f32.gmra.mrb[0].mxu0 %v829
        %v1119 = vpop.f32.mrb[0].mxu0
        %v1120 = vadd.f32 0.0, %v1119
        %v1121 = vpop.f32.mrb[0].mxu0
        %v1122 = vadd.f32 0.0, %v1121
        %1123 = vmatprep.mubr.f32.mxu0 0.0
        %1124 = vmatmul.mubr.f32.gmra.mrb[0].mxu0 %v832
        %v1125 = vpop.f32.mrb[0].mxu0
        %v1126 = vadd.f32 0.0, %v1125
        %v1127 = vpop.f32.mrb[0].mxu0
        %v1128 = vadd.f32 0.0, %v1127
        %1129 = vmatprep.mubr.f32.mxu0 0.0
        %1130 = vmatmul.mubr.f32.gmra.mrb[0].mxu0 %v835
        %v1131 = vpop.f32.mrb[0].mxu0
        %v1132 = vadd.f32 0.0, %v1131
        %v1133 = vpop.f32.mrb[0].mxu0
        %v1134 = vadd.f32 0.0, %v1133
        %1135 = vmatprep.mubr.f32.mxu0 0.0
        %1136 = vmatmul.mubr.f32.gmra.mrb[0].mxu0 %v838
        %v1137 = vpop.f32.mrb[0].mxu0
        %v1138 = vadd.f32 0.0, %v1137
        %v1139 = vpop.f32.mrb[0].mxu0
        %v1140 = vadd.f32 0.0, %v1139
        %1141 = vmatprep.mubr.f32.mxu0 0.0
        %1142 = vmatmul.mubr.f32.gmra.mrb[0].mxu0 %v841
        %v1143 = vpop.f32.mrb[0].mxu0
        %v1144 = vadd.f32 0.0, %v1143
        %v1145 = vpop.f32.mrb[0].mxu0
        %v1146 = vadd.f32 0.0, %v1145
        %1147 = vmatprep.mubr.f32.mxu0 0.0
        %1148 = vmatmul.mubr.f32.gmra.mrb[0].mxu0 %v844
        %v1149 = vpop.f32.mrb[0].mxu0
        %v1150 = vadd.f32 0.0, %v1149
        %v1151 = vpop.f32.mrb[0].mxu0
        %v1152 = vadd.f32 0.0, %v1151
        %1153 = vmatprep.mubr.f32.mxu0 0.0
        %1154 = vmatmul.mubr.f32.gmra.mrb[0].mxu0 %v847
        %v1155 = vpop.f32.mrb[0].mxu0
        %v1156 = vadd.f32 0.0, %v1155
        %v1157 = vpop.f32.mrb[0].mxu0
        %v1158 = vadd.f32 0.0, %v1157
        %1159 = vmatprep.mubr.f32.mxu0 0.0
        %1160 = vmatmul.mubr.f32.gmra.mrb[0].mxu0 %v850
        %v1161 = vpop.f32.mrb[0].mxu0
        %v1162 = vadd.f32 0.0, %v1161
        %v1163 = vpop.f32.mrb[0].mxu0
        %v1164 = vadd.f32 0.0, %v1163
        %1165 = vmatprep.mubr.f32.mxu0 0.0
        %1166 = vmatmul.mubr.f32.gmra.mrb[0].mxu0 %v853
        %v1167 = vpop.f32.mrb[0].mxu0
        %v1168 = vadd.f32 0.0, %v1167
        %v1169 = vpop.f32.mrb[0].mxu0
        %v1170 = vadd.f32 0.0, %v1169
        %1171 = vmatprep.mubr.f32.mxu0 0.0
        %1172 = vmatmul.mubr.f32.gmra.mrb[0].mxu0 %v856
        %v1173 = vpop.f32.mrb[0].mxu0
        %v1174 = vadd.f32 0.0, %v1173
        %v1175 = vpop.f32.mrb[0].mxu0
        %v1176 = vadd.f32 0.0, %v1175
        %1177 = vmatprep.mubr.f32.mxu0 0.0
        %1178 = vmatmul.mubr.f32.gmra.mrb[0].mxu0 %v859
        %v1179 = vpop.f32.mrb[0].mxu0
        %v1180 = vadd.f32 0.0, %v1179
        %v1181 = vpop.f32.mrb[0].mxu0
        %v1182 = vadd.f32 0.0, %v1181
        %1183 = vmatprep.mubr.f32.mxu0 0.0
        %1184 = vmatmul.mubr.f32.gmra.mrb[0].mxu0 %v862
        %v1185 = vpop.f32.mrb[0].mxu0
        %v1186 = vadd.f32 0.0, %v1185
        %v1187 = vpop.f32.mrb[0].mxu0
        %v1188 = vadd.f32 0.0, %v1187
        %1189 = vmatprep.mubr.f32.mxu0 0.0
        %1190 = vmatmul.mubr.f32.gmra.mrb[0].mxu0 %v865
        %v1191 = vpop.f32.mrb[0].mxu0
        %v1192 = vadd.f32 0.0, %v1191
        %v1193 = vpop.f32.mrb[0].mxu0
        %v1194 = vadd.f32 0.0, %v1193
        %1195 = vmatprep.mubr.f32.mxu0 0.0
        %1196 = vmatmul.mubr.f32.gmra.mrb[0].mxu0 %v868
        %v1197 = vpop.f32.mrb[0].mxu0
        %v1198 = vadd.f32 0.0, %v1197
        %v1199 = vpop.f32.mrb[0].mxu0
        %v1200 = vadd.f32 0.0, %v1199
        %1201 = vmatprep.mubr.f32.mxu0 0.0
        %1202 = vmatmul.mubr.f32.gmra.mrb[0].mxu0 %v871
        %v1203 = vpop.f32.mrb[0].mxu0
        %v1204 = vadd.f32 0.0, %v1203
        %v1205 = vpop.f32.mrb[0].mxu0
        %v1206 = vadd.f32 0.0, %v1205
        %1207 = vmatprep.mubr.f32.mxu0 0.0
        %1208 = vmatmul.mubr.f32.gmra.mrb[0].mxu0 %v874
        %v1209 = vpop.f32.mrb[0].mxu0
        %v1210 = vadd.f32 0.0, %v1209
        %v1211 = vpop.f32.mrb[0].mxu0
        %v1212 = vadd.f32 0.0, %v1211
        %1213 = vmatprep.mubr.f32.mxu0 0.0
        %1214 = vmatmul.mubr.f32.gmra.mrb[0].mxu0 %v877
        %v1215 = vpop.f32.mrb[0].mxu0
        %v1216 = vadd.f32 0.0, %v1215
        %v1217 = vpop.f32.mrb[0].mxu0
        %v1218 = vadd.f32 0.0, %v1217
        %1219 = vmatprep.mubr.f32.mxu0 0.0
        %1220 = vmatmul.mubr.f32.gmra.mrb[0].mxu0 %v880
        %v1221 = vpop.f32.mrb[0].mxu0
        %v1222 = vadd.f32 0.0, %v1221
        %v1223 = vpop.f32.mrb[0].mxu0
        %v1224 = vadd.f32 0.0, %v1223
        %1225 = vmatprep.mubr.f32.mxu0 0.0
        %1226 = vmatmul.mubr.f32.gmra.mrb[0].mxu0 %v883
        %v1227 = vpop.f32.mrb[0].mxu0
        %v1228 = vadd.f32 0.0, %v1227
        %v1229 = vpop.f32.mrb[0].mxu0
        %v1230 = vadd.f32 0.0, %v1229
        %1231 = vmatprep.mubr.f32.mxu0 0.0
        %1232 = vmatmul.mubr.f32.gmra.mrb[0].mxu0 %v886
        %v1233 = vpop.f32.mrb[0].mxu0
        %v1234 = vadd.f32 0.0, %v1233
        %v1235 = vpop.f32.mrb[0].mxu0
        %v1236 = vadd.f32 0.0, %v1235
        %1237 = vmatprep.mubr.f32.mxu0 0.0
        %1238 = vmatmul.mubr.f32.gmra.mrb[0].mxu0 %v889
        %v1239 = vpop.f32.mrb[0].mxu0
        %v1240 = vadd.f32 0.0, %v1239
        %v1241 = vpop.f32.mrb[0].mxu0
        %v1242 = vadd.f32 0.0, %v1241
        %1243 = vmatprep.mubr.f32.mxu0 0.0
        %1244 = vmatmul.mubr.f32.gmra.mrb[0].mxu0 %v892
        %v1245 = vpop.f32.mrb[0].mxu0
        %v1246 = vadd.f32 0.0, %v1245
        %v1247 = vpop.f32.mrb[0].mxu0
        %v1248 = vadd.f32 0.0, %v1247
        %1249 = vmatprep.mubr.f32.mxu0 0.0
        %1250 = vmatmul.mubr.f32.gmra.mrb[0].mxu0 %v895
        %v1251 = vpop.f32.mrb[0].mxu0
        %v1252 = vadd.f32 0.0, %v1251
        %v1253 = vpop.f32.mrb[0].mxu0
        %v1254 = vadd.f32 0.0, %v1253
        %1255 = vmatprep.mubr.f32.mxu0 0.0
        %1256 = vmatmul.mubr.f32.gmra.mrb[0].mxu0 %v898
        %v1257 = vpop.f32.mrb[0].mxu0
        %v1258 = vadd.f32 0.0, %v1257
        %v1259 = vpop.f32.mrb[0].mxu0
        %v1260 = vadd.f32 0.0, %v1259
        %1261 = vmatprep.mubr.f32.mxu0 0.0
        %1262 = vmatmul.mubr.f32.gmra.mrb[0].mxu0 %v901
        %v1263 = vpop.f32.mrb[0].mxu0
        %v1264 = vadd.f32 0.0, %v1263
        %v1265 = vpop.f32.mrb[0].mxu0
        %v1266 = vadd.f32 0.0, %v1265
        %1267 = vmatprep.mubr.f32.mxu0 0.0
        %1268 = vmatmul.mubr.f32.gmra.mrb[0].mxu0 %v904
        %v1269 = vpop.f32.mrb[0].mxu0
        %v1270 = vadd.f32 0.0, %v1269
        %v1271 = vpop.f32.mrb[0].mxu0
        %v1272 = vadd.f32 0.0, %v1271
        %1273 = vmatprep.mubr.f32.mxu0 0.0
        %1274 = vmatmul.mubr.f32.gmra.mrb[0].mxu0 %v907
        %v1275 = vpop.f32.mrb[0].mxu0
        %v1276 = vadd.f32 0.0, %v1275
        %v1277 = vpop.f32.mrb[0].mxu0
        %v1278 = vadd.f32 0.0, %v1277
        %1279 = vmatprep.mubr.f32.mxu0 0.0
        %1280 = vmatmul.mubr.f32.gmra.mrb[0].mxu0 %v910
        %v1281 = vpop.f32.mrb[0].mxu0
        %v1282 = vadd.f32 0.0, %v1281
        %v1283 = vpop.f32.mrb[0].mxu0
        %v1284 = vadd.f32 0.0, %v1283
        %1285 = vmatprep.mubr.f32.mxu0 0.0
        %1286 = vmatmul.mubr.f32.gmra.mrb[0].mxu0 %v913
        %v1287 = vpop.f32.mrb[0].mxu0
        %v1288 = vadd.f32 0.0, %v1287
        %v1289 = vpop.f32.mrb[0].mxu0
        %v1290 = vadd.f32 0.0, %v1289
        %1291 = vmatprep.mubr.f32.mxu0 0.0
        %1292 = vmatmul.mubr.f32.gmra.mrb[0].mxu0 %v916
        %v1293 = vpop.f32.mrb[0].mxu0
        %v1294 = vadd.f32 0.0, %v1293
        %v1295 = vpop.f32.mrb[0].mxu0
        %v1296 = vadd.f32 0.0, %v1295
        %1297 = vmatprep.mubr.f32.mxu0 0.0
        %1298 = vmatmul.mubr.f32.gmra.mrb[0].mxu0 %v919
        %v1299 = vpop.f32.mrb[0].mxu0
        %v1300 = vadd.f32 0.0, %v1299
        %v1301 = vpop.f32.mrb[0].mxu0
        %v1302 = vadd.f32 0.0, %v1301
        %1303 = vmatprep.mubr.f32.mxu0 0.0
        %1304 = vmatmul.mubr.f32.gmra.mrb[0].mxu0 %v922
        %v1305 = vpop.f32.mrb[0].mxu0
        %v1306 = vadd.f32 0.0, %v1305
        %v1307 = vpop.f32.mrb[0].mxu0
        %v1308 = vadd.f32 0.0, %v1307
        %1309 = vmatprep.mubr.f32.mxu0 0.0
        %1310 = vmatmul.mubr.f32.gmra.mrb[0].mxu0 %v925
        %v1311 = vpop.f32.mrb[0].mxu0
        %v1312 = vadd.f32 0.0, %v1311
        %v1313 = vpop.f32.mrb[0].mxu0
        %v1314 = vadd.f32 0.0, %v1313
        %1315 = vmatprep.mubr.f32.mxu0 0.0
        %1316 = vmatmul.mubr.f32.gmra.mrb[0].mxu0 %v928
        %v1317 = vpop.f32.mrb[0].mxu0
        %v1318 = vadd.f32 0.0, %v1317
        %v1319 = vpop.f32.mrb[0].mxu0
        %v1320 = vadd.f32 0.0, %v1319
        %1321 = vmatprep.mubr.f32.mxu0 0.0
        %1322 = vmatmul.mubr.f32.gmra.mrb[0].mxu0 %v931
        %v1323 = vpop.f32.mrb[0].mxu0
        %v1324 = vadd.f32 0.0, %v1323
        %v1325 = vpop.f32.mrb[0].mxu0
        %v1326 = vadd.f32 0.0, %v1325
        %1327 = vmatprep.mubr.f32.mxu0 0.0
        %1328 = vmatmul.mubr.f32.gmra.mrb[0].mxu0 %v934
        %v1329 = vpop.f32.mrb[0].mxu0
        %v1330 = vadd.f32 0.0, %v1329
        %v1331 = vpop.f32.mrb[0].mxu0
        %v1332 = vadd.f32 0.0, %v1331
        %1333 = vmatprep.mubr.f32.mxu0 0.0
        %1334 = vmatmul.mubr.f32.gmra.mrb[0].mxu0 %v937
        %v1335 = vpop.f32.mrb[0].mxu0
        %v1336 = vadd.f32 0.0, %v1335
        %v1337 = vpop.f32.mrb[0].mxu0
        %v1338 = vadd.f32 0.0, %v1337
        %1339 = vmatprep.mubr.f32.mxu0 0.0
        %1340 = vmatmul.mubr.f32.gmra.mrb[0].mxu0 %v940
        %v1341 = vpop.f32.mrb[0].mxu0
        %v1342 = vadd.f32 0.0, %v1341
        %v1343 = vpop.f32.mrb[0].mxu0
        %v1344 = vadd.f32 0.0, %v1343
        %1345 = vmatprep.mubr.f32.mxu0 0.0
        %1346 = vmatmul.mubr.f32.gmra.mrb[0].mxu0 %v943
        %v1347 = vpop.f32.mrb[0].mxu0
        %v1348 = vadd.f32 0.0, %v1347
        %v1349 = vpop.f32.mrb[0].mxu0
        %v1350 = vadd.f32 0.0, %v1349
        %1351 = vmatprep.mubr.f32.mxu0 0.0
        %1352 = vmatmul.mubr.f32.gmra.mrb[0].mxu0 %v946
        %v1353 = vpop.f32.mrb[0].mxu0
        %v1354 = vadd.f32 0.0, %v1353
        %v1355 = vpop.f32.mrb[0].mxu0
        %v1356 = vadd.f32 0.0, %v1355
        %1357 = vmatprep.mubr.f32.mxu0 0.0
        %1358 = vmatmul.mubr.f32.gmra.mrb[0].mxu0 %v949
        %v1359 = vpop.f32.mrb[0].mxu0
        %v1360 = vadd.f32 0.0, %v1359
        %v1361 = vpop.f32.mrb[0].mxu0
        %v1362 = vadd.f32 0.0, %v1361
        %1363 = vmatprep.mubr.f32.mxu0 0.0
        %1364 = vmatmul.mubr.f32.gmra.mrb[0].mxu0 %v952
        %v1365 = vpop.f32.mrb[0].mxu0
        %v1366 = vadd.f32 0.0, %v1365
        %v1367 = vpop.f32.mrb[0].mxu0
        %v1368 = vadd.f32 0.0, %v1367
        %1369 = vmatprep.mubr.f32.mxu0 0.0
        %1370 = vmatmul.mubr.f32.gmra.mrb[0].mxu0 %v955
        %v1371 = vpop.f32.mrb[0].mxu0
        %v1372 = vadd.f32 0.0, %v1371
        %v1373 = vpop.f32.mrb[0].mxu0
        %v1374 = vadd.f32 0.0, %v1373
        %1375 = vmatprep.mubr.f32.mxu0 0.0
        %1376 = vmatmul.mubr.f32.gmra.mrb[0].mxu0 %v958
        %v1377 = vpop.f32.mrb[0].mxu0
        %v1378 = vadd.f32 0.0, %v1377
        %v1379 = vpop.f32.mrb[0].mxu0
        %v1380 = vadd.f32 0.0, %v1379
        %1381 = vmatprep.mubr.f32.mxu0 0.0
        %1382 = vmatmul.mubr.f32.gmra.mrb[0].mxu0 %v961
        %v1383 = vpop.f32.mrb[0].mxu0
        %v1384 = vadd.f32 0.0, %v1383
        %v1385 = vpop.f32.mrb[0].mxu0
        %v1386 = vadd.f32 0.0, %v1385
        %1387 = vmatprep.mubr.f32.mxu0 0.0
        %1388 = vmatmul.mubr.f32.gmra.mrb[0].mxu0 %v964
        %v1389 = vpop.f32.mrb[0].mxu0
        %v1390 = vadd.f32 0.0, %v1389
        %v1391 = vpop.f32.mrb[0].mxu0
        %v1392 = vadd.f32 0.0, %v1391
        %1393 = vmatprep.mubr.f32.mxu0 0.0
        %1394 = vmatmul.mubr.f32.gmra.mrb[0].mxu0 %v967
        %v1395 = vpop.f32.mrb[0].mxu0
        %v1396 = vadd.f32 0.0, %v1395
        %v1397 = vpop.f32.mrb[0].mxu0
        %v1398 = vadd.f32 0.0, %v1397
        %1399 = vmatprep.mubr.f32.mxu0 0.0
        %1400 = vmatmul.mubr.f32.gmra.mrb[0].mxu0 %v970
        %v1401 = vpop.f32.mrb[0].mxu0
        %v1402 = vadd.f32 0.0, %v1401
        %v1403 = vpop.f32.mrb[0].mxu0
        %v1404 = vadd.f32 0.0, %v1403
        %1405 = vmatprep.mubr.f32.mxu0 0.0
        %1406 = vmatmul.mubr.f32.gmra.mrb[0].mxu0 %v973
        %v1407 = vpop.f32.mrb[0].mxu0
        %v1408 = vadd.f32 0.0, %v1407
        %v1409 = vpop.f32.mrb[0].mxu0
        %v1410 = vadd.f32 0.0, %v1409
        %1411 = vmatprep.mubr.f32.mxu0 0.0
        %1412 = vmatmul.mubr.f32.gmra.mrb[0].mxu0 %v976
        %v1413 = vpop.f32.mrb[0].mxu0
        %v1414 = vadd.f32 0.0, %v1413
        %v1415 = vpop.f32.mrb[0].mxu0
        %v1416 = vadd.f32 0.0, %v1415
        %1417 = vmatprep.mubr.f32.mxu0 0.0
        %1418 = vmatmul.mubr.f32.gmra.mrb[0].mxu0 %v979
        %v1419 = vpop.f32.mrb[0].mxu0
        %v1420 = vadd.f32 0.0, %v1419
        %v1421 = vpop.f32.mrb[0].mxu0
        %v1422 = vadd.f32 0.0, %v1421
        %1423 = vmatprep.mubr.f32.mxu0 0.0
        %1424 = vmatmul.mubr.f32.gmra.mrb[0].mxu0 %v982
        %v1425 = vpop.f32.mrb[0].mxu0
        %v1426 = vadd.f32 0.0, %v1425
        %v1427 = vpop.f32.mrb[0].mxu0
        %v1428 = vadd.f32 0.0, %v1427
        %1429 = vmatprep.mubr.f32.mxu0 0.0
        %1430 = vmatmul.mubr.f32.gmra.mrb[0].mxu0 %v985
        %v1431 = vpop.f32.mrb[0].mxu0
        %v1432 = vadd.f32 0.0, %v1431
        %v1433 = vpop.f32.mrb[0].mxu0
        %v1434 = vadd.f32 0.0, %v1433
        %1435 = vdwg.mxu0
        %1436 = vst [vmem:[%s204] sm:$0xff] %v1054
        %1437 = vst [vmem:[%s204 + $0x8] sm:$0xff] %v1056
        %1438 = vst [vmem:[%s204 + $0x10] sm:$0xff] %v1060
        %1439 = vst [vmem:[%s204 + $0x18] sm:$0xff] %v1062
        %1440 = vst [vmem:[%s204 + $0x20] sm:$0xff] %v1066
        %1441 = vst [vmem:[%s204 + $0x28] sm:$0xff] %v1068
        %1442 = vst [vmem:[%s204 + $0x30] sm:$0xff] %v1072
        %1443 = vst [vmem:[%s204 + $0x38] sm:$0xff] %v1074
        %1444 = vst [vmem:[%s204 + $0x40] sm:$0xff] %v1078
        %1445 = vst [vmem:[%s204 + $0x48] sm:$0xff] %v1080
        %1446 = vst [vmem:[%s204 + $0x50] sm:$0xff] %v1084
        %1447 = vst [vmem:[%s204 + $0x58] sm:$0xff] %v1086
        %1448 = vst [vmem:[%s204 + $0x60] sm:$0xff] %v1090
        %1449 = vst [vmem:[%s204 + $0x68] sm:$0xff] %v1092
        %1450 = vst [vmem:[%s204 + $0x70] sm:$0xff] %v1096
        %1451 = vst [vmem:[%s204 + $0x78] sm:$0xff] %v1098
        %1452 = vst [vmem:[%s204 + $0x80] sm:$0xff] %v1102
        %1453 = vst [vmem:[%s204 + $0x88] sm:$0xff] %v1104
        %1454 = vst [vmem:[%s204 + $0x90] sm:$0xff] %v1108
        %1455 = vst [vmem:[%s204 + $0x98] sm:$0xff] %v1110
        %1456 = vst [vmem:[%s204 + $0xa0] sm:$0xff] %v1114
        %1457 = vst [vmem:[%s204 + $0xa8] sm:$0xff] %v1116
        %1458 = vst [vmem:[%s204 + $0xb0] sm:$0xff] %v1120
        %1459 = vst [vmem:[%s204 + $0xb8] sm:$0xff] %v1122
        %1460 = vst [vmem:[%s204 + $0xc0] sm:$0xff] %v1126
        %1461 = vst [vmem:[%s204 + $0xc8] sm:$0xff] %v1128
        %1462 = vst [vmem:[%s204 + $0xd0] sm:$0xff] %v1132
        %1463 = vst [vmem:[%s204 + $0xd8] sm:$0xff] %v1134
        %1464 = vst [vmem:[%s204 + $0xe0] sm:$0xff] %v1138
        %1465 = vst [vmem:[%s204 + $0xe8] sm:$0xff] %v1140
        %1466 = vst [vmem:[%s204 + $0xf0] sm:$0xff] %v1144
        %1467 = vst [vmem:[%s204 + $0xf8] sm:$0xff] %v1146
        %1468 = vst [vmem:[%s204 + $0x100] sm:$0xff] %v1150
        %1469 = vst [vmem:[%s204 + $0x108] sm:$0xff] %v1152
        %1470 = vst [vmem:[%s204 + $0x110] sm:$0xff] %v1156
        %1471 = vst [vmem:[%s204 + $0x118] sm:$0xff] %v1158
        %1472 = vst [vmem:[%s204 + $0x120] sm:$0xff] %v1162
        %1473 = vst [vmem:[%s204 + $0x128] sm:$0xff] %v1164
        %1474 = vst [vmem:[%s204 + $0x130] sm:$0xff] %v1168
        %1475 = vst [vmem:[%s204 + $0x138] sm:$0xff] %v1170
        %1476 = vst [vmem:[%s204 + $0x140] sm:$0xff] %v1174
        %1477 = vst [vmem:[%s204 + $0x148] sm:$0xff] %v1176
        %1478 = vst [vmem:[%s204 + $0x150] sm:$0xff] %v1180
        %1479 = vst [vmem:[%s204 + $0x158] sm:$0xff] %v1182
        %1480 = vst [vmem:[%s204 + $0x160] sm:$0xff] %v1186
        %1481 = vst [vmem:[%s204 + $0x168] sm:$0xff] %v1188
        %1482 = vst [vmem:[%s204 + $0x170] sm:$0xff] %v1192
        %1483 = vst [vmem:[%s204 + $0x178] sm:$0xff] %v1194
        %1484 = vst [vmem:[%s204 + $0x180] sm:$0xff] %v1198
        %1485 = vst [vmem:[%s204 + $0x188] sm:$0xff] %v1200
        %1486 = vst [vmem:[%s204 + $0x190] sm:$0xff] %v1204
        %1487 = vst [vmem:[%s204 + $0x198] sm:$0xff] %v1206
        %1488 = vst [vmem:[%s204 + $0x1a0] sm:$0xff] %v1210
        %1489 = vst [vmem:[%s204 + $0x1a8] sm:$0xff] %v1212
        %1490 = vst [vmem:[%s204 + $0x1b0] sm:$0xff] %v1216
        %1491 = vst [vmem:[%s204 + $0x1b8] sm:$0xff] %v1218
        %1492 = vst [vmem:[%s204 + $0x1c0] sm:$0xff] %v1222
        %1493 = vst [vmem:[%s204 + $0x1c8] sm:$0xff] %v1224
        %1494 = vst [vmem:[%s204 + $0x1d0] sm:$0xff] %v1228
        %1495 = vst [vmem:[%s204 + $0x1d8] sm:$0xff] %v1230
        %1496 = vst [vmem:[%s204 + $0x1e0] sm:$0xff] %v1234
        %1497 = vst [vmem:[%s204 + $0x1e8] sm:$0xff] %v1236
        %1498 = vst [vmem:[%s204 + $0x1f0] sm:$0xff] %v1240
        %1499 = vst [vmem:[%s204 + $0x1f8] sm:$0xff] %v1242
        %1500 = vst [vmem:[%s204 + $0x200] sm:$0xff] %v1246
        %1501 = vst [vmem:[%s204 + $0x208] sm:$0xff] %v1248
        %1502 = vst [vmem:[%s204 + $0x210] sm:$0xff] %v1252
        %1503 = vst [vmem:[%s204 + $0x218] sm:$0xff] %v1254
        %1504 = vst [vmem:[%s204 + $0x220] sm:$0xff] %v1258
        %1505 = vst [vmem:[%s204 + $0x228] sm:$0xff] %v1260
        %1506 = vst [vmem:[%s204 + $0x230] sm:$0xff] %v1264
        %1507 = vst [vmem:[%s204 + $0x238] sm:$0xff] %v1266
        %1508 = vst [vmem:[%s204 + $0x240] sm:$0xff] %v1270
        %1509 = vst [vmem:[%s204 + $0x248] sm:$0xff] %v1272
        %1510 = vst [vmem:[%s204 + $0x250] sm:$0xff] %v1276
        %1511 = vst [vmem:[%s204 + $0x258] sm:$0xff] %v1278
        %1512 = vst [vmem:[%s204 + $0x260] sm:$0xff] %v1282
        %1513 = vst [vmem:[%s204 + $0x268] sm:$0xff] %v1284
        %1514 = vst [vmem:[%s204 + $0x270] sm:$0xff] %v1288
        %1515 = vst [vmem:[%s204 + $0x278] sm:$0xff] %v1290
        %1516 = vst [vmem:[%s204 + $0x280] sm:$0xff] %v1294
        %1517 = vst [vmem:[%s204 + $0x288] sm:$0xff] %v1296
        %1518 = vst [vmem:[%s204 + $0x290] sm:$0xff] %v1300
        %1519 = vst [vmem:[%s204 + $0x298] sm:$0xff] %v1302
        %1520 = vst [vmem:[%s204 + $0x2a0] sm:$0xff] %v1306
        %1521 = vst [vmem:[%s204 + $0x2a8] sm:$0xff] %v1308
        %1522 = vst [vmem:[%s204 + $0x2b0] sm:$0xff] %v1312
        %1523 = vst [vmem:[%s204 + $0x2b8] sm:$0xff] %v1314
        %1524 = vst [vmem:[%s204 + $0x2c0] sm:$0xff] %v1318
        %1525 = vst [vmem:[%s204 + $0x2c8] sm:$0xff] %v1320
        %1526 = vst [vmem:[%s204 + $0x2d0] sm:$0xff] %v1324
        %1527 = vst [vmem:[%s204 + $0x2d8] sm:$0xff] %v1326
        %1528 = vst [vmem:[%s204 + $0x2e0] sm:$0xff] %v1330
        %1529 = vst [vmem:[%s204 + $0x2e8] sm:$0xff] %v1332
        %1530 = vst [vmem:[%s204 + $0x2f0] sm:$0xff] %v1336
        %1531 = vst [vmem:[%s204 + $0x2f8] sm:$0xff] %v1338
        %1532 = vst [vmem:[%s204 + $0x300] sm:$0xff] %v1342
        %1533 = vst [vmem:[%s204 + $0x308] sm:$0xff] %v1344
        %1534 = vst [vmem:[%s204 + $0x310] sm:$0xff] %v1348
        %1535 = vst [vmem:[%s204 + $0x318] sm:$0xff] %v1350
        %1536 = vst [vmem:[%s204 + $0x320] sm:$0xff] %v1354
        %1537 = vst [vmem:[%s204 + $0x328] sm:$0xff] %v1356
        %1538 = vst [vmem:[%s204 + $0x330] sm:$0xff] %v1360
        %1539 = vst [vmem:[%s204 + $0x338] sm:$0xff] %v1362
        %1540 = vst [vmem:[%s204 + $0x340] sm:$0xff] %v1366
        %1541 = vst [vmem:[%s204 + $0x348] sm:$0xff] %v1368
        %1542 = vst [vmem:[%s204 + $0x350] sm:$0xff] %v1372
        %1543 = vst [vmem:[%s204 + $0x358] sm:$0xff] %v1374
        %1544 = vst [vmem:[%s204 + $0x360] sm:$0xff] %v1378
        %1545 = vst [vmem:[%s204 + $0x368] sm:$0xff] %v1380
        %1546 = vst [vmem:[%s204 + $0x370] sm:$0xff] %v1384
        %1547 = vst [vmem:[%s204 + $0x378] sm:$0xff] %v1386
        %1548 = vst [vmem:[%s204 + $0x380] sm:$0xff] %v1390
        %1549 = vst [vmem:[%s204 + $0x388] sm:$0xff] %v1392
        %1550 = vst [vmem:[%s204 + $0x390] sm:$0xff] %v1396
        %1551 = vst [vmem:[%s204 + $0x398] sm:$0xff] %v1398
        %1552 = vst [vmem:[%s204 + $0x3a0] sm:$0xff] %v1402
        %1553 = vst [vmem:[%s204 + $0x3a8] sm:$0xff] %v1404
        %1554 = vst [vmem:[%s204 + $0x3b0] sm:$0xff] %v1408
        %1555 = vst [vmem:[%s204 + $0x3b8] sm:$0xff] %v1410
        %1556 = vst [vmem:[%s204 + $0x3c0] sm:$0xff] %v1414
        %1557 = vst [vmem:[%s204 + $0x3c8] sm:$0xff] %v1416
        %1558 = vst [vmem:[%s204 + $0x3d0] sm:$0xff] %v1420
        %1559 = vst [vmem:[%s204 + $0x3d8] sm:$0xff] %v1422
        %1560 = vst [vmem:[%s204 + $0x3e0] sm:$0xff] %v1426
        %1561 = vst [vmem:[%s204 + $0x3e8] sm:$0xff] %v1428
        %1562 = vst [vmem:[%s204 + $0x3f0] sm:$0xff] %v1432
        %1563 = vst [vmem:[%s204 + $0x3f8] sm:$0xff] %v1434
        %s1564 = sand.u32 %s97, 1
        %s1565 = scalar_lea.sflag [#allocation4], %s1564
        %s1566 = sand.u32 %s97, 1
        %s1567 = smul.addr %s1566, 1024
        %s1568 = scalar_lea.vmem [#allocation7], %s1567
        // Predicated region
        $region41: #{tpu_custom_call.1} parent=31 // pred_check
          %p1569 = pneg %p107
        $region42: #{tpu_custom_call.1} parent=31 // pred_check_branch
          %1571 = sbr.rel (%p1569) target = $region44
        $region43: #{tpu_custom_call.1} parent=31 // pred_region
          %s1572 = smul.u32 2, %s21
          %s1574 = ssub.s32 16384, 16384
          %1575 = vsyncadd %s1565, %s1574
          %s1576 = smul.addr %s1572, 64
          %s1577 = smul.addr %s1576, 128
          %s1578 = scalar_lea.hbm %s3, %s1577
          %s1579 = sshll.u32 %s1568, 4
          %s1580 = int_to_ptr.vmem [resolvable:$true] %s1579
          %1585 = dma.vmem_to_hbm [thread:$0]  %s1580, 16384, %s1578, %s1565, 256, 256, 16
        $region44: #{tpu_custom_call.1} parent=31 // pred_fallthru
          _
      $region32: #{tpu_custom_call.1} parent=5 // pred_fallthru
        _
      %p1586 = scmp.le.s32.totalorder 2, %s16
      // Predicated region
      $region45: #{tpu_custom_call.1} parent=5 // pred_check
        %p1587 = pneg %p1586
      $region46: #{tpu_custom_call.1} parent=5 // pred_check_branch
        %1589 = sbr.rel (%p1587) target = $region48
      $region47: #{tpu_custom_call.1} parent=5 // pred_region
        %s1590 = ssub.s32 %s16, 2
        // Predicated region
        $region49: #{tpu_custom_call.1} parent=47 // pred_check
          %p1591 = pneg %p113
        $region50: #{tpu_custom_call.1} parent=47 // pred_check_branch
          %1593 = sbr.rel (%p1591) target = $region52
        $region51: #{tpu_custom_call.1} parent=47 // pred_region
          %s1594 = sand.u32 %s98, 1
          %s1595 = scalar_lea.sflag [#allocation4], %s1594
          %s1596 = sand.u32 %s98, 1
          %s1597 = smul.addr %s1596, 1024
          %s1598 = scalar_lea.vmem [#allocation7], %s1597
          %1599 = dma.done %s1595, 16384
        $region52: #{tpu_custom_call.1} parent=47 // pred_fallthru
          _
      $region48: #{tpu_custom_call.1} parent=5 // pred_fallthru
        _
    $region6: #{tpu_custom_call.1} parent=1 // loop_footer
      %s20 = sadd.s32 1, %s16
    $region7: #{tpu_custom_call.1} parent=1 // loop_footer_branch
      %15 = sbr.rel target = $region3
    $region8: #{tpu_custom_call.1} parent=1 // loop_exit
      _
    %1600 = vsyncpa [#allocation3], 1
    %s1601 = scalar_lea.sflag [#allocation3], 1
    %1602 = vsyncpa %s1601, 1
    %1603 = vsyncpa [#allocation6], 1
    %s1604 = scalar_lea.sflag [#allocation6], 1
    %1605 = vsyncpa %s1604, 1
    %1606 = vsyncpa [#allocation4], 1
    %s1607 = scalar_lea.sflag [#allocation4], 1
    %1608 = vsyncpa %s1607, 1

</llo_original>
